<compile_context>
chip_gen: v5e
topology: v5e:2x2
jax: 0.10.0
libtpu: 0.0.40
codegen_flags: <defaults>
</compile_context>

<pallas_src>
import jax
import jax.numpy as jnp
import numpy as np
from jax.experimental import pallas as pl
from jax.experimental.pallas import tpu as pltpu

EPS = 1e-5


def _structure_matrices(N, H, W, Cin, Ch, Cout):
    """Static 0/1 matrices expressing upsample / padding / conv taps as matmuls."""
    H2, W2 = 2 * H, 2 * W

    # dx-tap band selector: sel[dx, js, j] = 1 iff (unpadded) input column js
    # feeds output column j through tap dx of a 3-wide kernel with zero pad 1.
    sel = np.zeros((3, W2, W2), np.float32)
    for dx in range(3):
        js = np.arange(W2) - 1 + dx
        ok = (js >= 0) & (js < W2)
        sel[dx, js[ok], np.arange(W2)[ok]] = 1.0

    # nearest x2 W-upsample, one-hot: U[js*Cin+c, ju*Cin+c] = 1 iff ju//2 == js.
    dup_w = np.zeros((W, W2), np.float32)
    dup_w[np.arange(W2) // 2, np.arange(W2)] = 1.0
    u_mat = np.kron(dup_w, np.eye(Cin, dtype=np.float32))      # (W*Cin, W2*Cin)

    # conv1 dy row-gathers on SOURCE rows (folds the x2 H-upsample + H zero pad):
    #   gm[dy, n*H2+i2, n*H+k] = 1 iff k == (i2+dy-1)//2 and 0 <= i2+dy-1 < H2
    # conv2 dy row-shifts on output-resolution rows (dy=0 and dy=2; center = I):
    #   hm[dy//2, n*H2+i2, n*H2+k] = 1 iff k == i2+dy-1 in range
    gm = np.zeros((3, N * H2, N * H), np.float32)
    hm = np.zeros((2, N * H2, N * H2), np.float32)
    for n in range(N):
        for i2 in range(H2):
            r = n * H2 + i2
            for dy in range(3):
                iu = i2 + dy - 1
                if 0 <= iu < H2:
                    gm[dy, r, n * H + iu // 2] = 1.0
                    if dy != 1:
                        hm[dy // 2, r, n * H2 + iu] = 1.0

    # per-channel fold + broadcast that stays on the lane axis:
    # (rows, W2*C) @ a -> every lane j*C+c holds the channel-c sum.
    a1 = np.tile(np.eye(Ch, dtype=np.float32), (W2, W2))
    a2 = np.tile(np.eye(Cout, dtype=np.float32), (W2, W2))
    return sel, u_mat, gm, hm, a1, a2


@jax.jit
def decoder_block_forward(x_nchw, p):
    """x_nchw: (N, Cin, H, W) f32 -> (N, Cout, 2H, 2W) f32 (training-mode BN)."""
    N, Cin, H, W = x_nchw.shape
    H2, W2 = 2 * H, 2 * W
    Ch = p["w1"].shape[-1]
    Cout = p["w2"].shape[-1]
    M2 = N * H2
    f32, bf16 = jnp.float32, jnp.bfloat16

    sel_np, u_np, gm_np, hm_np, a1_np, a2_np = _structure_matrices(
        N, H, W, Cin, Ch, Cout)
    sel = jnp.asarray(sel_np)
    u_mat = jnp.asarray(u_np)

    # Banded conv weights on the lane-collapsed (rows, W*C) layout.  W-upsample,
    # W zero-padding and the 3 dx taps are folded into these matrices, so the
    # kernel does no im2col / padding / interleaving work at all.
    def band(w_dy, cin, cout):                       # w_dy: (3, cin, cout)
        b = jnp.einsum('dsj,dio->sijo', sel, w_dy)
        return b.reshape(W2 * cin, W2 * cout)

    w1b = jnp.stack([u_mat @ band(p["w1"][dy], Cin, Ch) for dy in range(3)])
    w2b = jnp.stack([band(p["w2"][dy], Ch, Cout) for dy in range(3)])
    wskb = u_mat @ jnp.einsum('sj,io->sijo', jnp.eye(W2),
                              p["wup"]).reshape(W2 * Cin, W2 * Cout)

    lane = lambda v: jnp.tile(v, W2).reshape(1, -1).astype(f32)

    # conv biases b1/b2 are dropped (training-mode BN mean subtraction cancels
    # them exactly); bup (no BN on the skip path) is folded into the bn2 shift.
    operands = (
        jnp.transpose(x_nchw, (0, 2, 3, 1)).reshape(N * H, W * Cin).astype(bf16),
        jnp.asarray(gm_np, bf16),
        w1b.astype(bf16),
        wskb.astype(bf16),
        jnp.asarray(hm_np, bf16),
        w2b.astype(bf16),
        jnp.asarray(a1_np),
        jnp.asarray(a2_np),
        lane(p["g1"]), lane(p["be1"]),
        lane(p["g2"]), lane(p["be2"] + p["bup"]),
    )

    inv_cnt = 1.0 / float(N * H2 * W2)

    def kernel(x_ref, g_ref, w1_ref, wsk_ref, h_ref, w2_ref, a1_ref, a2_ref,
               g1_ref, be1_ref, g2_ref, be2_ref, out_ref):
        def channel_mean(z, a_ref):
            # per-channel mean over (rows, W2 lane-groups), broadcast back onto
            # the lane axis via a 0/1 matmul -> no lane<->sublane relayouts.
            k = z.shape[-1]
            if M2 % 8 == 0:
                zp = jnp.sum(z.reshape(M2 // 8, 8, k), axis=0)        # (8, k)
            else:
                zp = jnp.sum(z, axis=0, keepdims=True)
            f = jnp.dot(zp, a_ref[...], preferred_element_type=f32)   # fold+bcast
            return jnp.sum(f, axis=0, keepdims=True) * inv_cnt        # (1, k)

        xs = x_ref[...]                                               # (N*H, W*Cin)

        # upsample(x2) + 3x3 conv1: one-hot dy row-gathers x banded weights (MXU).
        t = [jnp.dot(g_ref[dy], xs, preferred_element_type=f32).astype(bf16)
             for dy in range(3)]                                      # (M2, W*Cin)
        y1 = jnp.dot(t[0], w1_ref[0], preferred_element_type=f32)
        y1 = y1 + jnp.dot(t[1], w1_ref[1], preferred_element_type=f32)
        y1 = y1 + jnp.dot(t[2], w1_ref[2], preferred_element_type=f32)

        # bn1 (training-mode batch stats, centred variance) + relu, lane-dense.
        m1 = channel_mean(y1, a1_ref)
        d1 = y1 - m1
        v1 = channel_mean(d1 * d1, a1_ref)
        s1 = g1_ref[...] * jax.lax.rsqrt(v1 + EPS)
        h1 = jnp.maximum(d1 * s1 + be1_ref[...], 0.0).astype(bf16)    # (M2, W2*Ch)

        # 3x3 conv2: center dy tap is the identity row-shift; edges use h_ref.
        y2 = jnp.dot(h1, w2_ref[1], preferred_element_type=f32)
        p0 = jnp.dot(h_ref[0], h1, preferred_element_type=f32).astype(bf16)
        y2 = y2 + jnp.dot(p0, w2_ref[0], preferred_element_type=f32)
        p2 = jnp.dot(h_ref[1], h1, preferred_element_type=f32).astype(bf16)
        y2 = y2 + jnp.dot(p2, w2_ref[2], preferred_element_type=f32)  # (M2, W2*Cout)

        # bn2 + skip (1x1 conv of the upsampled input; bup folded into be2) + relu.
        m2 = channel_mean(y2, a2_ref)
        d2 = y2 - m2
        v2 = channel_mean(d2 * d2, a2_ref)
        s2 = g2_ref[...] * jax.lax.rsqrt(v2 + EPS)
        skip = jnp.dot(t[1], wsk_ref[...], preferred_element_type=f32)
        out_ref[...] = jnp.maximum(d2 * s2 + be2_ref[...] + skip, 0.0)

    in_bytes = sum(int(np.prod(o.shape)) * o.dtype.itemsize for o in operands)
    out_bytes = M2 * W2 * Cout * 4
    vmem_limit = int(min(100 * 1024 * 1024,
                         max(8 * 1024 * 1024, 6 * (in_bytes + out_bytes))))

    flops = 2 * M2 * (N * H) * (W * Cin) * 3          # conv1 dy row gathers
    flops += 2 * M2 * (W * Cin) * (W2 * Ch) * 3       # conv1 banded matmuls
    flops += 2 * M2 * (W * Cin) * (W2 * Cout)         # fused 1x1 skip
    flops += 2 * M2 * M2 * (W2 * Ch) * 2              # conv2 edge row shifts
    flops += 2 * M2 * (W2 * Ch) * (W2 * Cout) * 3     # conv2 banded matmuls
    flops += 4 * 8 * ((W2 * Ch) ** 2 + (W2 * Cout) ** 2)   # BN channel folds
    cost = pl.CostEstimate(flops=int(flops),
                           transcendentals=int(W2 * (Ch + Cout)),
                           bytes_accessed=int(in_bytes + out_bytes))

    # TODO(synk): for VMEM-exceeding activations / v7x's second TensorCore, add a
    # row-tiled "parallel" grid + two-pass BatchNorm (per-tile sum / sum-of-squares
    # reduced over an "arbitrary" axis); batch-stat BN couples every spatial tile,
    # so that restructuring is out of scope for this single-shot VMEM-resident kernel.
    out2d = pl.pallas_call(
        kernel,
        out_shape=jax.ShapeDtypeStruct((M2, W2 * Cout), jnp.float32),
        in_specs=[pl.BlockSpec(memory_space=pltpu.MemorySpace.VMEM)] * len(operands),
        out_specs=pl.BlockSpec(memory_space=pltpu.MemorySpace.VMEM),
        compiler_params=pltpu.CompilerParams(vmem_limit_bytes=vmem_limit),
        cost_estimate=cost,
    )(*operands)

    out_nhwc = out2d.reshape(N, H2, W2, Cout)
    return jnp.transpose(out_nhwc, (0, 3, 1, 2))                      # NCHW


# ---------------------------- pure-JAX reference --------------------------------
def reference(x_nchw, p):
    def conv(x, w_hwio, b, pad):
        w = jnp.transpose(w_hwio, (3, 2, 0, 1))                       # OIHW
        y = jax.lax.conv_general_dilated(
            x, w, (1, 1), [(pad, pad), (pad, pad)],
            dimension_numbers=("NCHW", "OIHW", "NCHW"),
            precision=jax.lax.Precision.HIGHEST)
        return y + b.reshape(1, -1, 1, 1)

    def bn(x, g, be):
        mean = jnp.mean(x, axis=(0, 2, 3), keepdims=True)
        var = jnp.mean((x - mean) ** 2, axis=(0, 2, 3), keepdims=True)
        return (x - mean) / jnp.sqrt(var + EPS) * g.reshape(1, -1, 1, 1) \
               + be.reshape(1, -1, 1, 1)

    up = jnp.repeat(jnp.repeat(x_nchw, 2, axis=2), 2, axis=3)
    out = conv(up, p["w1"], p["b1"], 1)
    out = jnp.maximum(bn(out, p["g1"], p["be1"]), 0.0)
    out = conv(out, p["w2"], p["b2"], 1)
    out = bn(out, p["g2"], p["be2"])
    skip = conv(up, p["wup"].reshape(1, 1, *p["wup"].shape), p["bup"], 0)
    return jnp.maximum(out + skip, 0.0)


if __name__ == "__main__":
    # small shapes consistent with the module
    N, Cin, Ch, Cout, H, W = 2, 4, 8, 4, 16, 16

    key = jax.random.PRNGKey(0)
    ks = jax.random.split(key, 12)
    params = {
        "w1":  0.2 * jax.random.normal(ks[0], (3, 3, Cin, Ch), jnp.float32),
        "b1":  0.1 * jax.random.normal(ks[1], (Ch,), jnp.float32),
        "g1":  1.0 + 0.1 * jax.random.normal(ks[2], (Ch,), jnp.float32),
        "be1": 0.1 * jax.random.normal(ks[3], (Ch,), jnp.float32),
        "w2":  0.2 * jax.random.normal(ks[4], (3, 3, Ch, Cout), jnp.float32),
        "b2":  0.1 * jax.random.normal(ks[5], (Cout,), jnp.float32),
        "g2":  1.0 + 0.1 * jax.random.normal(ks[6], (Cout,), jnp.float32),
        "be2": 0.1 * jax.random.normal(ks[7], (Cout,), jnp.float32),
        "wup": 0.2 * jax.random.normal(ks[8], (Cin, Cout), jnp.float32),
        "bup": 0.1 * jax.random.normal(ks[9], (Cout,), jnp.float32),
    }

    x = jax.random.normal(ks[10], (N, Cin, H, W), jnp.float32)

    out = jax.block_until_ready(decoder_block_forward(x, params))
    ref = jax.block_until_ready(reference(x, params))

    assert out.shape == (N, Cout, 2 * H, 2 * W), out.shape
    assert np.all(np.isfinite(np.asarray(out)))
    # bf16 MXU inputs with f32 accumulation -> compare at bf16-level tolerance
    np.testing.assert_allclose(np.asarray(out), np.asarray(ref),
                               rtol=2e-2, atol=2e-2)
    print("KERNEL_OK")
</pallas_src>

<mosaic_0001>
module attributes {stable_mosaic.version = 11 : i64} {
  func.func @kernel(%arg0: memref<32x64xbf16, #tpu.memory_space<vmem>>, %arg1: memref<3x64x32xbf16, #tpu.memory_space<vmem>>, %arg2: memref<3x64x256xbf16, #tpu.memory_space<vmem>>, %arg3: memref<64x128xbf16, #tpu.memory_space<vmem>>, %arg4: memref<2x64x64xbf16, #tpu.memory_space<vmem>>, %arg5: memref<3x256x128xbf16, #tpu.memory_space<vmem>>, %arg6: memref<256x256xf32, #tpu.memory_space<vmem>>, %arg7: memref<128x128xf32, #tpu.memory_space<vmem>>, %arg8: memref<1x256xf32, #tpu.memory_space<vmem>>, %arg9: memref<1x256xf32, #tpu.memory_space<vmem>>, %arg10: memref<1x128xf32, #tpu.memory_space<vmem>>, %arg11: memref<1x128xf32, #tpu.memory_space<vmem>>, %arg12: memref<64x128xf32, #tpu.memory_space<vmem>>) attributes {dimension_semantics = [], scalar_prefetch = 0 : i64, scratch_operands = 0 : i64, tpu.core_type = #tpu.core_type<tc>} {
    %c0 = arith.constant 0 : index
    %c0_0 = arith.constant 0 : index
    %0 = vector.load %arg0[%c0, %c0_0] : memref<32x64xbf16, #tpu.memory_space<vmem>>, vector<32x64xbf16>
    %c0_1 = arith.constant 0 : index
    %c0_2 = arith.constant 0 : index
    %c0_3 = arith.constant 0 : index
    %1 = vector.load %arg1[%c0_1, %c0_2, %c0_3] : memref<3x64x32xbf16, #tpu.memory_space<vmem>>, vector<1x64x32xbf16>
    %2 = vector.shape_cast %1 : vector<1x64x32xbf16> to vector<64x32xbf16>
    %cst = arith.constant dense<0.000000e+00> : vector<64x64xf32>
    %3 = tpu.matmul %2, %0, %cst {dimension_numbers = #tpu.dot_dimension_numbers<[1], [0], [0], [1], [0, 0, 1, 1], [], []>} : vector<64x32xbf16>, vector<32x64xbf16>, vector<64x64xf32> -> vector<64x64xf32>
    %4 = arith.truncf %3 : vector<64x64xf32> to vector<64x64xbf16>
    %c1 = arith.constant 1 : index
    %c0_4 = arith.constant 0 : index
    %c0_5 = arith.constant 0 : index
    %5 = vector.load %arg1[%c1, %c0_4, %c0_5] : memref<3x64x32xbf16, #tpu.memory_space<vmem>>, vector<1x64x32xbf16>
    %6 = vector.shape_cast %5 : vector<1x64x32xbf16> to vector<64x32xbf16>
    %cst_6 = arith.constant dense<0.000000e+00> : vector<64x64xf32>
    %7 = tpu.matmul %6, %0, %cst_6 {dimension_numbers = #tpu.dot_dimension_numbers<[1], [0], [0], [1], [0, 0, 1, 1], [], []>} : vector<64x32xbf16>, vector<32x64xbf16>, vector<64x64xf32> -> vector<64x64xf32>
    %8 = arith.truncf %7 : vector<64x64xf32> to vector<64x64xbf16>
    %c2 = arith.constant 2 : index
    %c0_7 = arith.constant 0 : index
    %c0_8 = arith.constant 0 : index
    %9 = vector.load %arg1[%c2, %c0_7, %c0_8] : memref<3x64x32xbf16, #tpu.memory_space<vmem>>, vector<1x64x32xbf16>
    %10 = vector.shape_cast %9 : vector<1x64x32xbf16> to vector<64x32xbf16>
    %cst_9 = arith.constant dense<0.000000e+00> : vector<64x64xf32>
    %11 = tpu.matmul %10, %0, %cst_9 {dimension_numbers = #tpu.dot_dimension_numbers<[1], [0], [0], [1], [0, 0, 1, 1], [], []>} : vector<64x32xbf16>, vector<32x64xbf16>, vector<64x64xf32> -> vector<64x64xf32>
    %12 = arith.truncf %11 : vector<64x64xf32> to vector<64x64xbf16>
    %c0_10 = arith.constant 0 : index
    %c0_11 = arith.constant 0 : index
    %c0_12 = arith.constant 0 : index
    %13 = vector.load %arg2[%c0_10, %c0_11, %c0_12] : memref<3x64x256xbf16, #tpu.memory_space<vmem>>, vector<1x64x256xbf16>
    %14 = vector.shape_cast %13 : vector<1x64x256xbf16> to vector<64x256xbf16>
    %cst_13 = arith.constant dense<0.000000e+00> : vector<64x256xf32>
    %15 = tpu.matmul %4, %14, %cst_13 {dimension_numbers = #tpu.dot_dimension_numbers<[1], [0], [0], [1], [0, 0, 1, 1], [], []>} : vector<64x64xbf16>, vector<64x256xbf16>, vector<64x256xf32> -> vector<64x256xf32>
    %c1_14 = arith.constant 1 : index
    %c0_15 = arith.constant 0 : index
    %c0_16 = arith.constant 0 : index
    %16 = vector.load %arg2[%c1_14, %c0_15, %c0_16] : memref<3x64x256xbf16, #tpu.memory_space<vmem>>, vector<1x64x256xbf16>
    %17 = vector.shape_cast %16 : vector<1x64x256xbf16> to vector<64x256xbf16>
    %cst_17 = arith.constant dense<0.000000e+00> : vector<64x256xf32>
    %18 = tpu.matmul %8, %17, %cst_17 {dimension_numbers = #tpu.dot_dimension_numbers<[1], [0], [0], [1], [0, 0, 1, 1], [], []>} : vector<64x64xbf16>, vector<64x256xbf16>, vector<64x256xf32> -> vector<64x256xf32>
    %19 = arith.addf %15, %18 : vector<64x256xf32>
    %c2_18 = arith.constant 2 : index
    %c0_19 = arith.constant 0 : index
    %c0_20 = arith.constant 0 : index
    %20 = vector.load %arg2[%c2_18, %c0_19, %c0_20] : memref<3x64x256xbf16, #tpu.memory_space<vmem>>, vector<1x64x256xbf16>
    %21 = vector.shape_cast %20 : vector<1x64x256xbf16> to vector<64x256xbf16>
    %cst_21 = arith.constant dense<0.000000e+00> : vector<64x256xf32>
    %22 = tpu.matmul %12, %21, %cst_21 {dimension_numbers = #tpu.dot_dimension_numbers<[1], [0], [0], [1], [0, 0, 1, 1], [], []>} : vector<64x64xbf16>, vector<64x256xbf16>, vector<64x256xf32> -> vector<64x256xf32>
    %23 = arith.addf %19, %22 : vector<64x256xf32>
    %24 = vector.shape_cast %23 : vector<64x256xf32> to vector<8x8x256xf32>
    %cst_22 = arith.constant dense<0.000000e+00> : vector<8x256xf32>
    %25 = vector.multi_reduction <add>, %24, %cst_22 [0] : vector<8x8x256xf32> to vector<8x256xf32>
    %c0_23 = arith.constant 0 : index
    %c0_24 = arith.constant 0 : index
    %26 = vector.load %arg6[%c0_23, %c0_24] : memref<256x256xf32, #tpu.memory_space<vmem>>, vector<256x256xf32>
    %cst_25 = arith.constant dense<0.000000e+00> : vector<8x256xf32>
    %27 = tpu.matmul %25, %26, %cst_25 {dimension_numbers = #tpu.dot_dimension_numbers<[1], [0], [0], [1], [0, 0, 1, 1], [], []>} : vector<8x256xf32>, vector<256x256xf32>, vector<8x256xf32> -> vector<8x256xf32>
    %cst_26 = arith.constant dense<0.000000e+00> : vector<256xf32>
    %28 = vector.multi_reduction <add>, %27, %cst_26 [0] : vector<8x256xf32> to vector<256xf32>
    %29 = vector.shape_cast %28 : vector<256xf32> to vector<1x256xf32>
    %cst_27 = arith.constant 4.8828125E-4 : f32
    %30 = vector.broadcast %cst_27 : f32 to vector<1x256xf32>
    %31 = arith.mulf %29, %30 : vector<1x256xf32>
    %32 = vector.broadcast %31 : vector<1x256xf32> to vector<64x256xf32>
    %33 = arith.subf %23, %32 : vector<64x256xf32>
    %34 = arith.mulf %33, %33 : vector<64x256xf32>
    %35 = vector.shape_cast %34 : vector<64x256xf32> to vector<8x8x256xf32>
    %cst_28 = arith.constant dense<0.000000e+00> : vector<8x256xf32>
    %36 = vector.multi_reduction <add>, %35, %cst_28 [0] : vector<8x8x256xf32> to vector<8x256xf32>
    %c0_29 = arith.constant 0 : index
    %c0_30 = arith.constant 0 : index
    %37 = vector.load %arg6[%c0_29, %c0_30] : memref<256x256xf32, #tpu.memory_space<vmem>>, vector<256x256xf32>
    %cst_31 = arith.constant dense<0.000000e+00> : vector<8x256xf32>
    %38 = tpu.matmul %36, %37, %cst_31 {dimension_numbers = #tpu.dot_dimension_numbers<[1], [0], [0], [1], [0, 0, 1, 1], [], []>} : vector<8x256xf32>, vector<256x256xf32>, vector<8x256xf32> -> vector<8x256xf32>
    %cst_32 = arith.constant dense<0.000000e+00> : vector<256xf32>
    %39 = vector.multi_reduction <add>, %38, %cst_32 [0] : vector<8x256xf32> to vector<256xf32>
    %40 = vector.shape_cast %39 : vector<256xf32> to vector<1x256xf32>
    %cst_33 = arith.constant 4.8828125E-4 : f32
    %41 = vector.broadcast %cst_33 : f32 to vector<1x256xf32>
    %42 = arith.mulf %40, %41 : vector<1x256xf32>
    %c0_34 = arith.constant 0 : index
    %c0_35 = arith.constant 0 : index
    %43 = vector.load %arg8[%c0_34, %c0_35] : memref<1x256xf32, #tpu.memory_space<vmem>>, vector<1x256xf32>
    %cst_36 = arith.constant 9.99999974E-6 : f32
    %44 = vector.broadcast %cst_36 : f32 to vector<1x256xf32>
    %45 = arith.addf %42, %44 : vector<1x256xf32>
    %46 = math.rsqrt %45 : vector<1x256xf32>
    %47 = arith.mulf %43, %46 : vector<1x256xf32>
    %48 = vector.broadcast %47 : vector<1x256xf32> to vector<64x256xf32>
    %49 = arith.mulf %33, %48 : vector<64x256xf32>
    %c0_37 = arith.constant 0 : index
    %c0_38 = arith.constant 0 : index
    %50 = vector.load %arg9[%c0_37, %c0_38] : memref<1x256xf32, #tpu.memory_space<vmem>>, vector<1x256xf32>
    %51 = vector.broadcast %50 : vector<1x256xf32> to vector<64x256xf32>
    %52 = arith.addf %49, %51 : vector<64x256xf32>
    %cst_39 = arith.constant 0.000000e+00 : f32
    %53 = vector.broadcast %cst_39 : f32 to vector<64x256xf32>
    %54 = arith.maximumf %52, %53 : vector<64x256xf32>
    %55 = arith.truncf %54 : vector<64x256xf32> to vector<64x256xbf16>
    %c1_40 = arith.constant 1 : index
    %c0_41 = arith.constant 0 : index
    %c0_42 = arith.constant 0 : index
    %56 = vector.load %arg5[%c1_40, %c0_41, %c0_42] : memref<3x256x128xbf16, #tpu.memory_space<vmem>>, vector<1x256x128xbf16>
    %57 = vector.shape_cast %56 : vector<1x256x128xbf16> to vector<256x128xbf16>
    %cst_43 = arith.constant dense<0.000000e+00> : vector<64x128xf32>
    %58 = tpu.matmul %55, %57, %cst_43 {dimension_numbers = #tpu.dot_dimension_numbers<[1], [0], [0], [1], [0, 0, 1, 1], [], []>} : vector<64x256xbf16>, vector<256x128xbf16>, vector<64x128xf32> -> vector<64x128xf32>
    %c0_44 = arith.constant 0 : index
    %c0_45 = arith.constant 0 : index
    %c0_46 = arith.constant 0 : index
    %59 = vector.load %arg4[%c0_44, %c0_45, %c0_46] : memref<2x64x64xbf16, #tpu.memory_space<vmem>>, vector<1x64x64xbf16>
    %60 = vector.shape_cast %59 : vector<1x64x64xbf16> to vector<64x64xbf16>
    %cst_47 = arith.constant dense<0.000000e+00> : vector<64x256xf32>
    %61 = tpu.matmul %60, %55, %cst_47 {dimension_numbers = #tpu.dot_dimension_numbers<[1], [0], [0], [1], [0, 0, 1, 1], [], []>} : vector<64x64xbf16>, vector<64x256xbf16>, vector<64x256xf32> -> vector<64x256xf32>
    %62 = arith.truncf %61 : vector<64x256xf32> to vector<64x256xbf16>
    %c0_48 = arith.constant 0 : index
    %c0_49 = arith.constant 0 : index
    %c0_50 = arith.constant 0 : index
    %63 = vector.load %arg5[%c0_48, %c0_49, %c0_50] : memref<3x256x128xbf16, #tpu.memory_space<vmem>>, vector<1x256x128xbf16>
    %64 = vector.shape_cast %63 : vector<1x256x128xbf16> to vector<256x128xbf16>
    %cst_51 = arith.constant dense<0.000000e+00> : vector<64x128xf32>
    %65 = tpu.matmul %62, %64, %cst_51 {dimension_numbers = #tpu.dot_dimension_numbers<[1], [0], [0], [1], [0, 0, 1, 1], [], []>} : vector<64x256xbf16>, vector<256x128xbf16>, vector<64x128xf32> -> vector<64x128xf32>
    %66 = arith.addf %58, %65 : vector<64x128xf32>
    %c1_52 = arith.constant 1 : index
    %c0_53 = arith.constant 0 : index
    %c0_54 = arith.constant 0 : index
    %67 = vector.load %arg4[%c1_52, %c0_53, %c0_54] : memref<2x64x64xbf16, #tpu.memory_space<vmem>>, vector<1x64x64xbf16>
    %68 = vector.shape_cast %67 : vector<1x64x64xbf16> to vector<64x64xbf16>
    %cst_55 = arith.constant dense<0.000000e+00> : vector<64x256xf32>
    %69 = tpu.matmul %68, %55, %cst_55 {dimension_numbers = #tpu.dot_dimension_numbers<[1], [0], [0], [1], [0, 0, 1, 1], [], []>} : vector<64x64xbf16>, vector<64x256xbf16>, vector<64x256xf32> -> vector<64x256xf32>
    %70 = arith.truncf %69 : vector<64x256xf32> to vector<64x256xbf16>
    %c2_56 = arith.constant 2 : index
    %c0_57 = arith.constant 0 : index
    %c0_58 = arith.constant 0 : index
    %71 = vector.load %arg5[%c2_56, %c0_57, %c0_58] : memref<3x256x128xbf16, #tpu.memory_space<vmem>>, vector<1x256x128xbf16>
    %72 = vector.shape_cast %71 : vector<1x256x128xbf16> to vector<256x128xbf16>
    %cst_59 = arith.constant dense<0.000000e+00> : vector<64x128xf32>
    %73 = tpu.matmul %70, %72, %cst_59 {dimension_numbers = #tpu.dot_dimension_numbers<[1], [0], [0], [1], [0, 0, 1, 1], [], []>} : vector<64x256xbf16>, vector<256x128xbf16>, vector<64x128xf32> -> vector<64x128xf32>
    %74 = arith.addf %66, %73 : vector<64x128xf32>
    %75 = vector.shape_cast %74 : vector<64x128xf32> to vector<8x8x128xf32>
    %cst_60 = arith.constant dense<0.000000e+00> : vector<8x128xf32>
    %76 = vector.multi_reduction <add>, %75, %cst_60 [0] : vector<8x8x128xf32> to vector<8x128xf32>
    %c0_61 = arith.constant 0 : index
    %c0_62 = arith.constant 0 : index
    %77 = vector.load %arg7[%c0_61, %c0_62] : memref<128x128xf32, #tpu.memory_space<vmem>>, vector<128x128xf32>
    %cst_63 = arith.constant dense<0.000000e+00> : vector<8x128xf32>
    %78 = tpu.matmul %76, %77, %cst_63 {dimension_numbers = #tpu.dot_dimension_numbers<[1], [0], [0], [1], [0, 0, 1, 1], [], []>} : vector<8x128xf32>, vector<128x128xf32>, vector<8x128xf32> -> vector<8x128xf32>
    %cst_64 = arith.constant dense<0.000000e+00> : vector<128xf32>
    %79 = vector.multi_reduction <add>, %78, %cst_64 [0] : vector<8x128xf32> to vector<128xf32>
    %80 = vector.shape_cast %79 : vector<128xf32> to vector<1x128xf32>
    %cst_65 = arith.constant 4.8828125E-4 : f32
    %81 = vector.broadcast %cst_65 : f32 to vector<1x128xf32>
    %82 = arith.mulf %80, %81 : vector<1x128xf32>
    %83 = vector.broadcast %82 : vector<1x128xf32> to vector<64x128xf32>
    %84 = arith.subf %74, %83 : vector<64x128xf32>
    %85 = arith.mulf %84, %84 : vector<64x128xf32>
    %86 = vector.shape_cast %85 : vector<64x128xf32> to vector<8x8x128xf32>
    %cst_66 = arith.constant dense<0.000000e+00> : vector<8x128xf32>
    %87 = vector.multi_reduction <add>, %86, %cst_66 [0] : vector<8x8x128xf32> to vector<8x128xf32>
    %c0_67 = arith.constant 0 : index
    %c0_68 = arith.constant 0 : index
    %88 = vector.load %arg7[%c0_67, %c0_68] : memref<128x128xf32, #tpu.memory_space<vmem>>, vector<128x128xf32>
    %cst_69 = arith.constant dense<0.000000e+00> : vector<8x128xf32>
    %89 = tpu.matmul %87, %88, %cst_69 {dimension_numbers = #tpu.dot_dimension_numbers<[1], [0], [0], [1], [0, 0, 1, 1], [], []>} : vector<8x128xf32>, vector<128x128xf32>, vector<8x128xf32> -> vector<8x128xf32>
    %cst_70 = arith.constant dense<0.000000e+00> : vector<128xf32>
    %90 = vector.multi_reduction <add>, %89, %cst_70 [0] : vector<8x128xf32> to vector<128xf32>
    %91 = vector.shape_cast %90 : vector<128xf32> to vector<1x128xf32>
    %cst_71 = arith.constant 4.8828125E-4 : f32
    %92 = vector.broadcast %cst_71 : f32 to vector<1x128xf32>
    %93 = arith.mulf %91, %92 : vector<1x128xf32>
    %c0_72 = arith.constant 0 : index
    %c0_73 = arith.constant 0 : index
    %94 = vector.load %arg10[%c0_72, %c0_73] : memref<1x128xf32, #tpu.memory_space<vmem>>, vector<1x128xf32>
    %cst_74 = arith.constant 9.99999974E-6 : f32
    %95 = vector.broadcast %cst_74 : f32 to vector<1x128xf32>
    %96 = arith.addf %93, %95 : vector<1x128xf32>
    %97 = math.rsqrt %96 : vector<1x128xf32>
    %98 = arith.mulf %94, %97 : vector<1x128xf32>
    %c0_75 = arith.constant 0 : index
    %c0_76 = arith.constant 0 : index
    %99 = vector.load %arg3[%c0_75, %c0_76] : memref<64x128xbf16, #tpu.memory_space<vmem>>, vector<64x128xbf16>
    %cst_77 = arith.constant dense<0.000000e+00> : vector<64x128xf32>
    %100 = tpu.matmul %8, %99, %cst_77 {dimension_numbers = #tpu.dot_dimension_numbers<[1], [0], [0], [1], [0, 0, 1, 1], [], []>} : vector<64x64xbf16>, vector<64x128xbf16>, vector<64x128xf32> -> vector<64x128xf32>
    %101 = vector.broadcast %98 : vector<1x128xf32> to vector<64x128xf32>
    %102 = arith.mulf %84, %101 : vector<64x128xf32>
    %c0_78 = arith.constant 0 : index
    %c0_79 = arith.constant 0 : index
    %103 = vector.load %arg11[%c0_78, %c0_79] : memref<1x128xf32, #tpu.memory_space<vmem>>, vector<1x128xf32>
    %104 = vector.broadcast %103 : vector<1x128xf32> to vector<64x128xf32>
    %105 = arith.addf %102, %104 : vector<64x128xf32>
    %106 = arith.addf %105, %100 : vector<64x128xf32>
    %cst_80 = arith.constant 0.000000e+00 : f32
    %107 = vector.broadcast %cst_80 : f32 to vector<64x128xf32>
    %108 = arith.maximumf %106, %107 : vector<64x128xf32>
    %c0_81 = arith.constant 0 : index
    %c0_82 = arith.constant 0 : index
    %109 = vector.load %arg12[%c0_81, %c0_82] : memref<64x128xf32, #tpu.memory_space<vmem>>, vector<64x128xf32>
    tpu.vector_store %arg12[%c0_81, %c0_82], %108 {strides = array<i32>} : memref<64x128xf32, #tpu.memory_space<vmem>>, vector<64x128xf32>,
    return
  }
}

</mosaic_0001>

<llo_original>
// kernel: tile.23
$region0: #{tile.23}
  #allocation0 [shape = 's32[1]{0}', space=sflag, size = 0x4, scoped, tag = 'scoped memory for tile.23']
  %s0 = inlined_call_operand.vmem [shape: f32[8], index: 0, kind: input, shape index: {}]
  %s1 = inlined_call_operand.vmem [shape: f32[32,8], index: 1, kind: output, shape index: {}]
  // Predicated region
  $region2: #{tile.23} parent=0 // pred_check
    _
  $region3: #{tile.23} parent=0 // pred_check_branch
    %3 = sbr.rel (0) target = $region5
  $region4: #{tile.23} parent=0 // pred_region
    _
  $region5: #{tile.23} parent=0 // pred_fallthru
    _
  %v4 = vld [vmem:[%s0] ss:$0 sm:$0xff]
  %5 = vst [vmem:[%s1] sm:$0xff] %v4
  %s6 = scalar_lea.vmem %s1, 8
  %7 = vst [vmem:[%s6] sm:$0xff] %v4
  %s8 = scalar_lea.vmem %s1, 16
  %9 = vst [vmem:[%s8] sm:$0xff] %v4
  %s10 = scalar_lea.vmem %s1, 24
  %11 = vst [vmem:[%s10] sm:$0xff] %v4

// kernel: tile.24
$region0: #{tile.24}
  %s0 = inlined_call_operand.vmem [shape: f32[32,8], index: 0, kind: input, shape index: {}]
  %s1 = inlined_call_operand.vmem [shape: f32[1,256], index: 1, kind: output, shape index: {}]
  $region1: #{tile.24} parent=0
    #allocation0 [shape = 'u8[8192]{0}', space=vmem, size = 0x2000, scoped, tag = 'scoped mem for output reshape']
    %s2 = smov 3
    %v3 = vld [vmem:[%s0] ss:$16 sm:%s2]
    %vm4 = vcmask 64512
    %5 = vst.msk [vmem:[#allocation0] ss:$8 sm:$0x3] %vm4, %v3
    %s6 = scalar_lea.vmem %s0, 15
    %s7 = smov 3
    %v8 = vld [vmem:[%s6] ss:$16 sm:%s7]
    %9 = vrot.lane.b32.xlu0 %v8, 120
    %v10 = vpop.permute.xlu0 %9
    %vm11 = vcmask 1048512
    %12 = vst.msk [vmem:[#allocation0] ss:$8 sm:$0x3] %vm11, %v10
    %s13 = scalar_lea.vmem %s0, 14
    %s14 = smov 3
    %v15 = vld [vmem:[%s13] ss:$16 sm:%s14]
    %16 = vrot.lane.b32.xlu0 %v15, 112
    %v17 = vpop.permute.xlu0 %16
    %vm18 = vcmask 982912
    %19 = vst.msk [vmem:[#allocation0] ss:$8 sm:$0x3] %vm18, %v17
    %s20 = scalar_lea.vmem %s0, 13
    %s21 = smov 3
    %v22 = vld [vmem:[%s20] ss:$16 sm:%s21]
    %23 = vrot.lane.b32.xlu0 %v22, 104
    %v24 = vpop.permute.xlu0 %23
    %vm25 = vcmask 917312
    %26 = vst.msk [vmem:[#allocation0] ss:$8 sm:$0x3] %vm25, %v24
    %s27 = scalar_lea.vmem %s0, 12
    %s28 = smov 3
    %v29 = vld [vmem:[%s27] ss:$16 sm:%s28]
    %30 = vrot.lane.b32.xlu0 %v29, 96
    %v31 = vpop.permute.xlu0 %30
    %vm32 = vcmask 851712
    %33 = vst.msk [vmem:[#allocation0] ss:$8 sm:$0x3] %vm32, %v31
    %s34 = scalar_lea.vmem %s0, 11
    %s35 = smov 3
    %v36 = vld [vmem:[%s34] ss:$16 sm:%s35]
    %37 = vrot.lane.b32.xlu0 %v36, 88
    %v38 = vpop.permute.xlu0 %37
    %vm39 = vcmask 786112
    %40 = vst.msk [vmem:[#allocation0] ss:$8 sm:$0x3] %vm39, %v38
    %s41 = scalar_lea.vmem %s0, 10
    %s42 = smov 3
    %v43 = vld [vmem:[%s41] ss:$16 sm:%s42]
    %44 = vrot.lane.b32.xlu0 %v43, 80
    %v45 = vpop.permute.xlu0 %44
    %vm46 = vcmask 720512
    %47 = vst.msk [vmem:[#allocation0] ss:$8 sm:$0x3] %vm46, %v45
    %s48 = scalar_lea.vmem %s0, 9
    %s49 = smov 3
    %v50 = vld [vmem:[%s48] ss:$16 sm:%s49]
    %51 = vrot.lane.b32.xlu0 %v50, 72
    %v52 = vpop.permute.xlu0 %51
    %vm53 = vcmask 654912
    %54 = vst.msk [vmem:[#allocation0] ss:$8 sm:$0x3] %vm53, %v52
    %s55 = scalar_lea.vmem %s0, 8
    %s56 = smov 3
    %v57 = vld [vmem:[%s55] ss:$16 sm:%s56]
    %58 = vrot.lane.b32.xlu0 %v57, 64
    %v59 = vpop.permute.xlu0 %58
    %vm60 = vcmask 589312
    %61 = vst.msk [vmem:[#allocation0] ss:$8 sm:$0x3] %vm60, %v59
    %s62 = scalar_lea.vmem %s0, 7
    %s63 = smov 3
    %v64 = vld [vmem:[%s62] ss:$16 sm:%s63]
    %65 = vrot.lane.b32.xlu0 %v64, 56
    %v66 = vpop.permute.xlu0 %65
    %vm67 = vcmask 523712
    %68 = vst.msk [vmem:[#allocation0] ss:$8 sm:$0x3] %vm67, %v66
    %s69 = scalar_lea.vmem %s0, 6
    %s70 = smov 3
    %v71 = vld [vmem:[%s69] ss:$16 sm:%s70]
    %72 = vrot.lane.b32.xlu0 %v71, 48
    %v73 = vpop.permute.xlu0 %72
    %vm74 = vcmask 458112
    %75 = vst.msk [vmem:[#allocation0] ss:$8 sm:$0x3] %vm74, %v73
    %s76 = scalar_lea.vmem %s0, 5
    %s77 = smov 3
    %v78 = vld [vmem:[%s76] ss:$16 sm:%s77]
    %79 = vrot.lane.b32.xlu0 %v78, 40
    %v80 = vpop.permute.xlu0 %79
    %vm81 = vcmask 392512
    %82 = vst.msk [vmem:[#allocation0] ss:$8 sm:$0x3] %vm81, %v80
    %s83 = scalar_lea.vmem %s0, 4
    %s84 = smov 3
    %v85 = vld [vmem:[%s83] ss:$16 sm:%s84]
    %86 = vrot.lane.b32.xlu0 %v85, 32
    %v87 = vpop.permute.xlu0 %86
    %vm88 = vcmask 326912
    %89 = vst.msk [vmem:[#allocation0] ss:$8 sm:$0x3] %vm88, %v87
    %s90 = scalar_lea.vmem %s0, 3
    %s91 = smov 3
    %v92 = vld [vmem:[%s90] ss:$16 sm:%s91]
    %93 = vrot.lane.b32.xlu0 %v92, 24
    %v94 = vpop.permute.xlu0 %93
    %vm95 = vcmask 261312
    %96 = vst.msk [vmem:[#allocation0] ss:$8 sm:$0x3] %vm95, %v94
    %s97 = scalar_lea.vmem %s0, 2
    %s98 = smov 3
    %v99 = vld [vmem:[%s97] ss:$16 sm:%s98]
    %100 = vrot.lane.b32.xlu0 %v99, 16
    %v101 = vpop.permute.xlu0 %100
    %vm102 = vcmask 195712
    %103 = vst.msk [vmem:[#allocation0] ss:$8 sm:$0x3] %vm102, %v101
    %s104 = scalar_lea.vmem %s0, 1
    %s105 = smov 3
    %v106 = vld [vmem:[%s104] ss:$16 sm:%s105]
    %107 = vrot.lane.b32.xlu0 %v106, 8
    %v108 = vpop.permute.xlu0 %107
    %vm109 = vcmask 130112
    %110 = vst.msk [vmem:[#allocation0] ss:$8 sm:$0x3] %vm109, %v108
    %s112 = ssub.s32 2, 1
    %v113 = vld [vmem:[#allocation0] sm:%s112]
    %s115 = ssub.s32 2, 1
    %116 = vst [vmem:[%s1] sm:%s115] %v113
    %s117 = scalar_lea.vmem [#allocation0], 8
    %v118 = vld [vmem:[%s117] sm:%s112]
    %s120 = ssub.s32 2, 1
    %s121 = scalar_lea.vmem %s1, 1
    %122 = vst [vmem:[%s121] sm:%s120] %v118

// kernel: tile.33
$region0: #{tile.33}
  #allocation0 [shape = 's32[1]{0}', space=sflag, size = 0x4, scoped, tag = 'scoped memory for tile.33']
  %s0 = inlined_call_operand.vmem [shape: f32[4], index: 0, kind: input, shape index: {}]
  %s1 = inlined_call_operand.vmem [shape: f32[32,4], index: 1, kind: output, shape index: {}]
  // Predicated region
  $region2: #{tile.33} parent=0 // pred_check
    _
  $region3: #{tile.33} parent=0 // pred_check_branch
    %3 = sbr.rel (0) target = $region5
  $region4: #{tile.33} parent=0 // pred_region
    _
  $region5: #{tile.33} parent=0 // pred_fallthru
    _
  %v4 = vld [vmem:[%s0] ss:$0 sm:$0xff]
  %5 = vst [vmem:[%s1] sm:$0xff] %v4
  %s6 = scalar_lea.vmem %s1, 8
  %7 = vst [vmem:[%s6] sm:$0xff] %v4
  %s8 = scalar_lea.vmem %s1, 16
  %9 = vst [vmem:[%s8] sm:$0xff] %v4
  %s10 = scalar_lea.vmem %s1, 24
  %11 = vst [vmem:[%s10] sm:$0xff] %v4

// kernel: tile.34
$region0: #{tile.34}
  %s0 = inlined_call_operand.vmem [shape: f32[32,4], index: 0, kind: input, shape index: {}]
  %s1 = inlined_call_operand.vmem [shape: f32[1,128], index: 1, kind: output, shape index: {}]
  $region1: #{tile.34} parent=0
    #allocation0 [shape = 'u8[4096]{0}', space=vmem, size = 0x1000, scoped, tag = 'scoped mem for output reshape']
    %v2 = vld [vmem:[%s0] sm:$0x1]
    %vm3 = vcmask 31744
    %4 = vst.msk [vmem:[#allocation0] sm:$0x1] %vm3, %v2
    %s5 = scalar_lea.vmem %s0, 31
    %v6 = vld [vmem:[%s5] sm:$0x1]
    %7 = vrot.lane.b32.xlu0 %v6, 124
    %v8 = vpop.permute.xlu0 %7
    %vm9 = vcmask 1048544
    %10 = vst.msk [vmem:[#allocation0] sm:$0x1] %vm9, %v8
    %s11 = scalar_lea.vmem %s0, 30
    %v12 = vld [vmem:[%s11] sm:$0x1]
    %13 = vrot.lane.b32.xlu0 %v12, 120
    %v14 = vpop.permute.xlu0 %13
    %vm15 = vcmask 1015744
    %16 = vst.msk [vmem:[#allocation0] sm:$0x1] %vm15, %v14
    %s17 = scalar_lea.vmem %s0, 29
    %v18 = vld [vmem:[%s17] sm:$0x1]
    %19 = vrot.lane.b32.xlu0 %v18, 116
    %v20 = vpop.permute.xlu0 %19
    %vm21 = vcmask 982944
    %22 = vst.msk [vmem:[#allocation0] sm:$0x1] %vm21, %v20
    %s23 = scalar_lea.vmem %s0, 28
    %v24 = vld [vmem:[%s23] sm:$0x1]
    %25 = vrot.lane.b32.xlu0 %v24, 112
    %v26 = vpop.permute.xlu0 %25
    %vm27 = vcmask 950144
    %28 = vst.msk [vmem:[#allocation0] sm:$0x1] %vm27, %v26
    %s29 = scalar_lea.vmem %s0, 27
    %v30 = vld [vmem:[%s29] sm:$0x1]
    %31 = vrot.lane.b32.xlu0 %v30, 108
    %v32 = vpop.permute.xlu0 %31
    %vm33 = vcmask 917344
    %34 = vst.msk [vmem:[#allocation0] sm:$0x1] %vm33, %v32
    %s35 = scalar_lea.vmem %s0, 26
    %v36 = vld [vmem:[%s35] sm:$0x1]
    %37 = vrot.lane.b32.xlu0 %v36, 104
    %v38 = vpop.permute.xlu0 %37
    %vm39 = vcmask 884544
    %40 = vst.msk [vmem:[#allocation0] sm:$0x1] %vm39, %v38
    %s41 = scalar_lea.vmem %s0, 25
    %v42 = vld [vmem:[%s41] sm:$0x1]
    %43 = vrot.lane.b32.xlu0 %v42, 100
    %v44 = vpop.permute.xlu0 %43
    %vm45 = vcmask 851744
    %46 = vst.msk [vmem:[#allocation0] sm:$0x1] %vm45, %v44
    %s47 = scalar_lea.vmem %s0, 24
    %v48 = vld [vmem:[%s47] sm:$0x1]
    %49 = vrot.lane.b32.xlu0 %v48, 96
    %v50 = vpop.permute.xlu0 %49
    %vm51 = vcmask 818944
    %52 = vst.msk [vmem:[#allocation0] sm:$0x1] %vm51, %v50
    %s53 = scalar_lea.vmem %s0, 23
    %v54 = vld [vmem:[%s53] sm:$0x1]
    %55 = vrot.lane.b32.xlu0 %v54, 92
    %v56 = vpop.permute.xlu0 %55
    %vm57 = vcmask 786144
    %58 = vst.msk [vmem:[#allocation0] sm:$0x1] %vm57, %v56
    %s59 = scalar_lea.vmem %s0, 22
    %v60 = vld [vmem:[%s59] sm:$0x1]
    %61 = vrot.lane.b32.xlu0 %v60, 88
    %v62 = vpop.permute.xlu0 %61
    %vm63 = vcmask 753344
    %64 = vst.msk [vmem:[#allocation0] sm:$0x1] %vm63, %v62
    %s65 = scalar_lea.vmem %s0, 21
    %v66 = vld [vmem:[%s65] sm:$0x1]
    %67 = vrot.lane.b32.xlu0 %v66, 84
    %v68 = vpop.permute.xlu0 %67
    %vm69 = vcmask 720544
    %70 = vst.msk [vmem:[#allocation0] sm:$0x1] %vm69, %v68
    %s71 = scalar_lea.vmem %s0, 20
    %v72 = vld [vmem:[%s71] sm:$0x1]
    %73 = vrot.lane.b32.xlu0 %v72, 80
    %v74 = vpop.permute.xlu0 %73
    %vm75 = vcmask 687744
    %76 = vst.msk [vmem:[#allocation0] sm:$0x1] %vm75, %v74
    %s77 = scalar_lea.vmem %s0, 19
    %v78 = vld [vmem:[%s77] sm:$0x1]
    %79 = vrot.lane.b32.xlu0 %v78, 76
    %v80 = vpop.permute.xlu0 %79
    %vm81 = vcmask 654944
    %82 = vst.msk [vmem:[#allocation0] sm:$0x1] %vm81, %v80
    %s83 = scalar_lea.vmem %s0, 18
    %v84 = vld [vmem:[%s83] sm:$0x1]
    %85 = vrot.lane.b32.xlu0 %v84, 72
    %v86 = vpop.permute.xlu0 %85
    %vm87 = vcmask 622144
    %88 = vst.msk [vmem:[#allocation0] sm:$0x1] %vm87, %v86
    %s89 = scalar_lea.vmem %s0, 17
    %v90 = vld [vmem:[%s89] sm:$0x1]
    %91 = vrot.lane.b32.xlu0 %v90, 68
    %v92 = vpop.permute.xlu0 %91
    %vm93 = vcmask 589344
    %94 = vst.msk [vmem:[#allocation0] sm:$0x1] %vm93, %v92
    %s95 = scalar_lea.vmem %s0, 16
    %v96 = vld [vmem:[%s95] sm:$0x1]
    %97 = vrot.lane.b32.xlu0 %v96, 64
    %v98 = vpop.permute.xlu0 %97
    %vm99 = vcmask 556544
    %100 = vst.msk [vmem:[#allocation0] sm:$0x1] %vm99, %v98
    %s101 = scalar_lea.vmem %s0, 15
    %v102 = vld [vmem:[%s101] sm:$0x1]
    %103 = vrot.lane.b32.xlu0 %v102, 60
    %v104 = vpop.permute.xlu0 %103
    %vm105 = vcmask 523744
    %106 = vst.msk [vmem:[#allocation0] sm:$0x1] %vm105, %v104
    %s107 = scalar_lea.vmem %s0, 14
    %v108 = vld [vmem:[%s107] sm:$0x1]
    %109 = vrot.lane.b32.xlu0 %v108, 56
    %v110 = vpop.permute.xlu0 %109
    %vm111 = vcmask 490944
    %112 = vst.msk [vmem:[#allocation0] sm:$0x1] %vm111, %v110
    %s113 = scalar_lea.vmem %s0, 13
    %v114 = vld [vmem:[%s113] sm:$0x1]
    %115 = vrot.lane.b32.xlu0 %v114, 52
    %v116 = vpop.permute.xlu0 %115
    %vm117 = vcmask 458144
    %118 = vst.msk [vmem:[#allocation0] sm:$0x1] %vm117, %v116
    %s119 = scalar_lea.vmem %s0, 12
    %v120 = vld [vmem:[%s119] sm:$0x1]
    %121 = vrot.lane.b32.xlu0 %v120, 48
    %v122 = vpop.permute.xlu0 %121
    %vm123 = vcmask 425344
    %124 = vst.msk [vmem:[#allocation0] sm:$0x1] %vm123, %v122
    %s125 = scalar_lea.vmem %s0, 11
    %v126 = vld [vmem:[%s125] sm:$0x1]
    %127 = vrot.lane.b32.xlu0 %v126, 44
    %v128 = vpop.permute.xlu0 %127
    %vm129 = vcmask 392544
    %130 = vst.msk [vmem:[#allocation0] sm:$0x1] %vm129, %v128
    %s131 = scalar_lea.vmem %s0, 10
    %v132 = vld [vmem:[%s131] sm:$0x1]
    %133 = vrot.lane.b32.xlu0 %v132, 40
    %v134 = vpop.permute.xlu0 %133
    %vm135 = vcmask 359744
    %136 = vst.msk [vmem:[#allocation0] sm:$0x1] %vm135, %v134
    %s137 = scalar_lea.vmem %s0, 9
    %v138 = vld [vmem:[%s137] sm:$0x1]
    %139 = vrot.lane.b32.xlu0 %v138, 36
    %v140 = vpop.permute.xlu0 %139
    %vm141 = vcmask 326944
    %142 = vst.msk [vmem:[#allocation0] sm:$0x1] %vm141, %v140
    %s143 = scalar_lea.vmem %s0, 8
    %v144 = vld [vmem:[%s143] sm:$0x1]
    %145 = vrot.lane.b32.xlu0 %v144, 32
    %v146 = vpop.permute.xlu0 %145
    %vm147 = vcmask 294144
    %148 = vst.msk [vmem:[#allocation0] sm:$0x1] %vm147, %v146
    %s149 = scalar_lea.vmem %s0, 7
    %v150 = vld [vmem:[%s149] sm:$0x1]
    %151 = vrot.lane.b32.xlu0 %v150, 28
    %v152 = vpop.permute.xlu0 %151
    %vm153 = vcmask 261344
    %154 = vst.msk [vmem:[#allocation0] sm:$0x1] %vm153, %v152
    %s155 = scalar_lea.vmem %s0, 6
    %v156 = vld [vmem:[%s155] sm:$0x1]
    %157 = vrot.lane.b32.xlu0 %v156, 24
    %v158 = vpop.permute.xlu0 %157
    %vm159 = vcmask 228544
    %160 = vst.msk [vmem:[#allocation0] sm:$0x1] %vm159, %v158
    %s161 = scalar_lea.vmem %s0, 5
    %v162 = vld [vmem:[%s161] sm:$0x1]
    %163 = vrot.lane.b32.xlu0 %v162, 20
    %v164 = vpop.permute.xlu0 %163
    %vm165 = vcmask 195744
    %166 = vst.msk [vmem:[#allocation0] sm:$0x1] %vm165, %v164
    %s167 = scalar_lea.vmem %s0, 4
    %v168 = vld [vmem:[%s167] sm:$0x1]
    %169 = vrot.lane.b32.xlu0 %v168, 16
    %v170 = vpop.permute.xlu0 %169
    %vm171 = vcmask 162944
    %172 = vst.msk [vmem:[#allocation0] sm:$0x1] %vm171, %v170
    %s173 = scalar_lea.vmem %s0, 3
    %v174 = vld [vmem:[%s173] sm:$0x1]
    %175 = vrot.lane.b32.xlu0 %v174, 12
    %v176 = vpop.permute.xlu0 %175
    %vm177 = vcmask 130144
    %178 = vst.msk [vmem:[#allocation0] sm:$0x1] %vm177, %v176
    %s179 = scalar_lea.vmem %s0, 2
    %v180 = vld [vmem:[%s179] sm:$0x1]
    %181 = vrot.lane.b32.xlu0 %v180, 8
    %v182 = vpop.permute.xlu0 %181
    %vm183 = vcmask 97344
    %184 = vst.msk [vmem:[#allocation0] sm:$0x1] %vm183, %v182
    %s185 = scalar_lea.vmem %s0, 1
    %v186 = vld [vmem:[%s185] sm:$0x1]
    %187 = vrot.lane.b32.xlu0 %v186, 4
    %v188 = vpop.permute.xlu0 %187
    %vm189 = vcmask 64544
    %190 = vst.msk [vmem:[#allocation0] sm:$0x1] %vm189, %v188
    %s192 = ssub.s32 2, 1
    %v193 = vld [vmem:[#allocation0] sm:%s192]
    %s195 = ssub.s32 2, 1
    %196 = vst [vmem:[%s1] sm:%s195] %v193

// kernel: decoder_block_forward.1
$region0: #{decoder_block_forward.1}
  #allocation0 [shape = 'u32[]', space=smem, size = 0x4, offset = 0x4, fixed_abs, tag = 'smem constant byte address 0x4 - core index']
  #allocation1 [shape = 'u32[72,128]{1,0:T(1,128)}', space=vmem, size = 0x9000, scoped, tag = 'internal scratch']
  %s0 = inlined_call_operand.vmem [shape: bf16[32,64], index: 0, kind: input, shape index: {}]
  %s1 = inlined_call_operand.vmem [shape: bf16[3,64,32], index: 1, kind: input, shape index: {}]
  %s2 = inlined_call_operand.vmem [shape: bf16[3,64,256], index: 2, kind: input, shape index: {}]
  %s3 = inlined_call_operand.vmem [shape: bf16[64,128], index: 3, kind: input, shape index: {}]
  %s4 = inlined_call_operand.vmem [shape: bf16[2,64,64], index: 4, kind: input, shape index: {}]
  %s5 = inlined_call_operand.vmem [shape: bf16[3,256,128], index: 5, kind: input, shape index: {}]
  %s6 = inlined_call_operand.vmem [shape: f32[256,256], index: 6, kind: input, shape index: {}]
  %s7 = inlined_call_operand.vmem [shape: f32[128,128], index: 7, kind: input, shape index: {}]
  %s8 = inlined_call_operand.vmem [shape: f32[1,256], index: 8, kind: input, shape index: {}]
  %s9 = inlined_call_operand.vmem [shape: f32[1,256], index: 9, kind: input, shape index: {}]
  %s10 = inlined_call_operand.vmem [shape: f32[1,128], index: 10, kind: input, shape index: {}]
  %s11 = inlined_call_operand.vmem [shape: f32[1,128], index: 11, kind: input, shape index: {}]
  %s12 = inlined_call_operand.vmem [shape: f32[64,128], index: 12, kind: output, shape index: {}]
  %s13 = sld [smem:[#allocation0]]
  $region58: #{decoder_block_forward.1} parent=0
    _
  %s15 = ssub.s32 1, %s13
  %s16 = scalar_select 0, %s15, %s13
  // Predicated region
  $region2: #{decoder_block_forward.1} parent=0 // pred_check
    _
  $region3: #{decoder_block_forward.1} parent=0 // pred_check_branch
    %18 = sbr.rel (0) target = $region5
  $region4: #{decoder_block_forward.1} parent=0 // pred_region
    _
  $region5: #{decoder_block_forward.1} parent=0 // pred_fallthru
    _
  // Predicated region
  $region6: #{decoder_block_forward.1} parent=0 // pred_check
    _
  $region7: #{decoder_block_forward.1} parent=0 // pred_check_branch
    %20 = sbr.rel (0) target = $region9
  $region8: #{decoder_block_forward.1} parent=0 // pred_region
    _
  $region9: #{decoder_block_forward.1} parent=0 // pred_fallthru
    _
  // Predicated region
  $region10: #{decoder_block_forward.1} parent=0 // pred_check
    _
  $region11: #{decoder_block_forward.1} parent=0 // pred_check_branch
    %22 = sbr.rel (0) target = $region13
  $region12: #{decoder_block_forward.1} parent=0 // pred_region
    _
  $region13: #{decoder_block_forward.1} parent=0 // pred_fallthru
    _
  // Predicated region
  $region14: #{decoder_block_forward.1} parent=0 // pred_check
    _
  $region15: #{decoder_block_forward.1} parent=0 // pred_check_branch
    %24 = sbr.rel (0) target = $region17
  $region16: #{decoder_block_forward.1} parent=0 // pred_region
    _
  $region17: #{decoder_block_forward.1} parent=0 // pred_fallthru
    _
  // Predicated region
  $region18: #{decoder_block_forward.1} parent=0 // pred_check
    _
  $region19: #{decoder_block_forward.1} parent=0 // pred_check_branch
    %26 = sbr.rel (0) target = $region21
  $region20: #{decoder_block_forward.1} parent=0 // pred_region
    _
  $region21: #{decoder_block_forward.1} parent=0 // pred_fallthru
    _
  // Predicated region
  $region22: #{decoder_block_forward.1} parent=0 // pred_check
    _
  $region23: #{decoder_block_forward.1} parent=0 // pred_check_branch
    %28 = sbr.rel (0) target = $region25
  $region24: #{decoder_block_forward.1} parent=0 // pred_region
    _
  $region25: #{decoder_block_forward.1} parent=0 // pred_fallthru
    _
  // Predicated region
  $region26: #{decoder_block_forward.1} parent=0 // pred_check
    _
  $region27: #{decoder_block_forward.1} parent=0 // pred_check_branch
    %30 = sbr.rel (0) target = $region29
  $region28: #{decoder_block_forward.1} parent=0 // pred_region
    _
  $region29: #{decoder_block_forward.1} parent=0 // pred_fallthru
    _
  // Predicated region
  $region30: #{decoder_block_forward.1} parent=0 // pred_check
    _
  $region31: #{decoder_block_forward.1} parent=0 // pred_check_branch
    %32 = sbr.rel (0) target = $region33
  $region32: #{decoder_block_forward.1} parent=0 // pred_region
    _
  $region33: #{decoder_block_forward.1} parent=0 // pred_fallthru
    _
  // Predicated region
  $region34: #{decoder_block_forward.1} parent=0 // pred_check
    _
  $region35: #{decoder_block_forward.1} parent=0 // pred_check_branch
    %34 = sbr.rel (0) target = $region37
  $region36: #{decoder_block_forward.1} parent=0 // pred_region
    _
  $region37: #{decoder_block_forward.1} parent=0 // pred_fallthru
    _
  // Predicated region
  $region38: #{decoder_block_forward.1} parent=0 // pred_check
    _
  $region39: #{decoder_block_forward.1} parent=0 // pred_check_branch
    %36 = sbr.rel (0) target = $region41
  $region40: #{decoder_block_forward.1} parent=0 // pred_region
    _
  $region41: #{decoder_block_forward.1} parent=0 // pred_fallthru
    _
  // Predicated region
  $region42: #{decoder_block_forward.1} parent=0 // pred_check
    _
  $region43: #{decoder_block_forward.1} parent=0 // pred_check_branch
    %38 = sbr.rel (0) target = $region45
  $region44: #{decoder_block_forward.1} parent=0 // pred_region
    _
  $region45: #{decoder_block_forward.1} parent=0 // pred_fallthru
    _
  // Predicated region
  $region46: #{decoder_block_forward.1} parent=0 // pred_check
    _
  $region47: #{decoder_block_forward.1} parent=0 // pred_check_branch
    %40 = sbr.rel (0) target = $region49
  $region48: #{decoder_block_forward.1} parent=0 // pred_region
    _
  $region49: #{decoder_block_forward.1} parent=0 // pred_fallthru
    _
  %v42 = vld [vmem:[%s0] sm:$0xf]
  %v43 = vld [vmem:[%s0 + $0x4] sm:$0xf]
  %v44 = vld [vmem:[%s0 + $0x8] sm:$0xf]
  %v45 = vld [vmem:[%s0 + $0xc] sm:$0xf]
  %v46 = vld [vmem:[%s1] sm:$0xf]
  %v47 = vld [vmem:[%s1 + $0x4] sm:$0xf]
  %v48 = vld [vmem:[%s1 + $0x8] sm:$0xf]
  %v49 = vld [vmem:[%s1 + $0xc] sm:$0xf]
  %v50 = vld [vmem:[%s1 + $0x10] sm:$0xf]
  %v51 = vld [vmem:[%s1 + $0x14] sm:$0xf]
  %v52 = vld [vmem:[%s1 + $0x18] sm:$0xf]
  %v53 = vld [vmem:[%s1 + $0x1c] sm:$0xf]
  %v62 = vunpack.c.l.b16 %v46
  %v63 = vunpack.c.l.b16 %v47
  %v64 = vunpack.c.l.b16 %v48
  %v65 = vunpack.c.l.b16 %v49
  %v66 = vunpack.c.l.b16 %v50
  %v67 = vunpack.c.l.b16 %v51
  %v68 = vunpack.c.l.b16 %v52
  %v69 = vunpack.c.l.b16 %v53
  %v70 = vpack.c.b16 %v63, %v62
  %v71 = vpack.c.b16 %v65, %v64
  %v72 = vpack.c.b16 %v67, %v66
  %v73 = vpack.c.b16 %v69, %v68
  %v78 = vunpack.c.l.b16 %v42
  %v79 = vunpack.c.l.b16 %v43
  %v80 = vunpack.c.l.b16 %v44
  %v81 = vunpack.c.l.b16 %v45
  %v82 = vpack.c.b16 %v79, %v78
  %v83 = vpack.c.b16 %v81, %v80
  %vm86 = vcmask 261120
  %v88 = vsel %vm86, %v70, 0
  %v91 = vsel %vm86, %v71, 0
  %v94 = vsel %vm86, %v72, 0
  %v97 = vsel %vm86, %v73, 0
  %99 = vmatpush.bf16.msra.mxu0 0
  %100 = vmatpush.bf16.msra.mxu0 0
  %101 = vmatpush.bf16.msra.mxu0 0
  %102 = vmatpush.bf16.msra.mxu0 0
  %103 = vmatpush.bf16.msra.mxu0 0
  %104 = vmatpush.bf16.msra.mxu0 0
  %105 = vmatpush.bf16.msra.mxu0 %v83
  %106 = vmatpush.bf16.msra.mxu0 %v82
  %107 = vmatmul.bf16.gmra.mxu0 %v88
  %v108 = vpop.f32.mrf.mxu0
  %v109 = vadd.f32 0.0, %v108
  %v110 = vpop.f32.mrf.mxu0
  %v111 = vadd.f32 0.0, %v110
  %112 = vmatmul.bf16.gmra.mxu0 %v91
  %v113 = vpop.f32.mrf.mxu0
  %v114 = vadd.f32 0.0, %v113
  %v115 = vpop.f32.mrf.mxu0
  %v116 = vadd.f32 0.0, %v115
  %117 = vmatmul.bf16.gmra.mxu0 %v94
  %v118 = vpop.f32.mrf.mxu0
  %v119 = vadd.f32 0.0, %v118
  %v120 = vpop.f32.mrf.mxu0
  %v121 = vadd.f32 0.0, %v120
  %122 = vmatmul.bf16.gmra.mxu0 %v97
  %v123 = vpop.f32.mrf.mxu0
  %v124 = vadd.f32 0.0, %v123
  %v125 = vpop.f32.mrf.mxu0
  %v126 = vadd.f32 0.0, %v125
  %127 = vdwg.mxu0
  %v128 = vpack.c.bf16 %v111, %v109
  %v129 = vpack.c.bf16 %v116, %v114
  %v130 = vpack.c.bf16 %v121, %v119
  %v131 = vpack.c.bf16 %v126, %v124
  %s132 = scalar_lea.vmem %s1, 32
  %v133 = vld [vmem:[%s132] sm:$0xf]
  %v134 = vld [vmem:[%s132 + $0x4] sm:$0xf]
  %v135 = vld [vmem:[%s132 + $0x8] sm:$0xf]
  %v136 = vld [vmem:[%s132 + $0xc] sm:$0xf]
  %v137 = vld [vmem:[%s132 + $0x10] sm:$0xf]
  %v138 = vld [vmem:[%s132 + $0x14] sm:$0xf]
  %v139 = vld [vmem:[%s132 + $0x18] sm:$0xf]
  %v140 = vld [vmem:[%s132 + $0x1c] sm:$0xf]
  %v149 = vunpack.c.l.b16 %v133
  %v150 = vunpack.c.l.b16 %v134
  %v151 = vunpack.c.l.b16 %v135
  %v152 = vunpack.c.l.b16 %v136
  %v153 = vunpack.c.l.b16 %v137
  %v154 = vunpack.c.l.b16 %v138
  %v155 = vunpack.c.l.b16 %v139
  %v156 = vunpack.c.l.b16 %v140
  %v157 = vpack.c.b16 %v150, %v149
  %v158 = vpack.c.b16 %v152, %v151
  %v159 = vpack.c.b16 %v154, %v153
  %v160 = vpack.c.b16 %v156, %v155
  %v162 = vsel %vm86, %v157, 0
  %v165 = vsel %vm86, %v158, 0
  %v168 = vsel %vm86, %v159, 0
  %v171 = vsel %vm86, %v160, 0
  %173 = vmatpush.bf16.msra.mxu0 0
  %174 = vmatpush.bf16.msra.mxu0 0
  %175 = vmatpush.bf16.msra.mxu0 0
  %176 = vmatpush.bf16.msra.mxu0 0
  %177 = vmatpush.bf16.msra.mxu0 0
  %178 = vmatpush.bf16.msra.mxu0 0
  %179 = vmatpush.bf16.msra.mxu0 %v83
  %180 = vmatpush.bf16.msra.mxu0 %v82
  %181 = vmatmul.bf16.gmra.mxu0 %v162
  %v182 = vpop.f32.mrf.mxu0
  %v183 = vadd.f32 0.0, %v182
  %v184 = vpop.f32.mrf.mxu0
  %v185 = vadd.f32 0.0, %v184
  %186 = vmatmul.bf16.gmra.mxu0 %v165
  %v187 = vpop.f32.mrf.mxu0
  %v188 = vadd.f32 0.0, %v187
  %v189 = vpop.f32.mrf.mxu0
  %v190 = vadd.f32 0.0, %v189
  %191 = vmatmul.bf16.gmra.mxu0 %v168
  %v192 = vpop.f32.mrf.mxu0
  %v193 = vadd.f32 0.0, %v192
  %v194 = vpop.f32.mrf.mxu0
  %v195 = vadd.f32 0.0, %v194
  %196 = vmatmul.bf16.gmra.mxu0 %v171
  %v197 = vpop.f32.mrf.mxu0
  %v198 = vadd.f32 0.0, %v197
  %v199 = vpop.f32.mrf.mxu0
  %v200 = vadd.f32 0.0, %v199
  %201 = vdwg.mxu0
  %v202 = vpack.c.bf16 %v185, %v183
  %v203 = vpack.c.bf16 %v190, %v188
  %v204 = vpack.c.bf16 %v195, %v193
  %v205 = vpack.c.bf16 %v200, %v198
  %s206 = scalar_lea.vmem %s1, 64
  %v207 = vld [vmem:[%s206] sm:$0xf]
  %v208 = vld [vmem:[%s206 + $0x4] sm:$0xf]
  %v209 = vld [vmem:[%s206 + $0x8] sm:$0xf]
  %v210 = vld [vmem:[%s206 + $0xc] sm:$0xf]
  %v211 = vld [vmem:[%s206 + $0x10] sm:$0xf]
  %v212 = vld [vmem:[%s206 + $0x14] sm:$0xf]
  %v213 = vld [vmem:[%s206 + $0x18] sm:$0xf]
  %v214 = vld [vmem:[%s206 + $0x1c] sm:$0xf]
  %v223 = vunpack.c.l.b16 %v207
  %v224 = vunpack.c.l.b16 %v208
  %v225 = vunpack.c.l.b16 %v209
  %v226 = vunpack.c.l.b16 %v210
  %v227 = vunpack.c.l.b16 %v211
  %v228 = vunpack.c.l.b16 %v212
  %v229 = vunpack.c.l.b16 %v213
  %v230 = vunpack.c.l.b16 %v214
  %v231 = vpack.c.b16 %v224, %v223
  %v232 = vpack.c.b16 %v226, %v225
  %v233 = vpack.c.b16 %v228, %v227
  %v234 = vpack.c.b16 %v230, %v229
  %v236 = vsel %vm86, %v231, 0
  %v239 = vsel %vm86, %v232, 0
  %v242 = vsel %vm86, %v233, 0
  %v245 = vsel %vm86, %v234, 0
  %247 = vmatpush.bf16.msra.mxu0 0
  %248 = vmatpush.bf16.msra.mxu0 0
  %249 = vmatpush.bf16.msra.mxu0 0
  %250 = vmatpush.bf16.msra.mxu0 0
  %251 = vmatpush.bf16.msra.mxu0 0
  %252 = vmatpush.bf16.msra.mxu0 0
  %253 = vmatpush.bf16.msra.mxu0 %v83
  %254 = vmatpush.bf16.msra.mxu0 %v82
  %255 = vmatmul.bf16.gmra.mxu0 %v236
  %v256 = vpop.f32.mrf.mxu0
  %v257 = vadd.f32 0.0, %v256
  %v258 = vpop.f32.mrf.mxu0
  %v259 = vadd.f32 0.0, %v258
  %260 = vmatmul.bf16.gmra.mxu0 %v239
  %v261 = vpop.f32.mrf.mxu0
  %v262 = vadd.f32 0.0, %v261
  %v263 = vpop.f32.mrf.mxu0
  %v264 = vadd.f32 0.0, %v263
  %265 = vmatmul.bf16.gmra.mxu0 %v242
  %v266 = vpop.f32.mrf.mxu0
  %v267 = vadd.f32 0.0, %v266
  %v268 = vpop.f32.mrf.mxu0
  %v269 = vadd.f32 0.0, %v268
  %270 = vmatmul.bf16.gmra.mxu0 %v245
  %v271 = vpop.f32.mrf.mxu0
  %v272 = vadd.f32 0.0, %v271
  %v273 = vpop.f32.mrf.mxu0
  %v274 = vadd.f32 0.0, %v273
  %275 = vdwg.mxu0
  %v276 = vpack.c.bf16 %v259, %v257
  %v277 = vpack.c.bf16 %v264, %v262
  %v278 = vpack.c.bf16 %v269, %v267
  %v279 = vpack.c.bf16 %v274, %v272
  %v280 = vld [vmem:[%s2] sm:$0xff]
  %v281 = vld [vmem:[%s2 + $0x8] sm:$0xff]
  %v282 = vld [vmem:[%s2 + $0x10] sm:$0xff]
  %v283 = vld [vmem:[%s2 + $0x18] sm:$0xff]
  %v284 = vld [vmem:[%s2 + $0x20] sm:$0xff]
  %v285 = vld [vmem:[%s2 + $0x28] sm:$0xff]
  %v286 = vld [vmem:[%s2 + $0x30] sm:$0xff]
  %v287 = vld [vmem:[%s2 + $0x38] sm:$0xff]
  %s288 = scalar_lea.vmem %s2, 64
  %v289 = vld [vmem:[%s288] sm:$0xff]
  %v290 = vld [vmem:[%s288 + $0x8] sm:$0xff]
  %v291 = vld [vmem:[%s288 + $0x10] sm:$0xff]
  %v292 = vld [vmem:[%s288 + $0x18] sm:$0xff]
  %v293 = vld [vmem:[%s288 + $0x20] sm:$0xff]
  %v294 = vld [vmem:[%s288 + $0x28] sm:$0xff]
  %v295 = vld [vmem:[%s288 + $0x30] sm:$0xff]
  %v296 = vld [vmem:[%s288 + $0x38] sm:$0xff]
  %v305 = vunpack.c.l.b16 %v289
  %v306 = vunpack.c.h.b16 %v289
  %v307 = vunpack.c.l.b16 %v290
  %v308 = vunpack.c.h.b16 %v290
  %v309 = vunpack.c.l.b16 %v291
  %v310 = vunpack.c.h.b16 %v291
  %v311 = vunpack.c.l.b16 %v292
  %v312 = vunpack.c.h.b16 %v292
  %v313 = vunpack.c.l.b16 %v293
  %v314 = vunpack.c.h.b16 %v293
  %v315 = vunpack.c.l.b16 %v294
  %v316 = vunpack.c.h.b16 %v294
  %v317 = vunpack.c.l.b16 %v295
  %v318 = vunpack.c.h.b16 %v295
  %v319 = vunpack.c.l.b16 %v296
  %v320 = vunpack.c.h.b16 %v296
  %v321 = vpack.c.b16 %v307, %v305
  %v322 = vpack.c.b16 %v308, %v306
  %v323 = vpack.c.b16 %v311, %v309
  %v324 = vpack.c.b16 %v312, %v310
  %v325 = vpack.c.b16 %v315, %v313
  %v326 = vpack.c.b16 %v316, %v314
  %v327 = vpack.c.b16 %v319, %v317
  %v328 = vpack.c.b16 %v320, %v318
  %vm337 = vcmask 523264
  %v339 = vsel %vm337, %v202, 0
  %v342 = vsel %vm337, %v203, 0
  %v345 = vsel %vm337, %v204, 0
  %v348 = vsel %vm337, %v205, 0
  %350 = vmatpush.bf16.msra.mxu0 0
  %351 = vmatpush.bf16.msra.mxu0 0
  %352 = vmatpush.bf16.msra.mxu0 0
  %353 = vmatpush.bf16.msra.mxu0 0
  %354 = vmatpush.bf16.msra.mxu0 %v327
  %355 = vmatpush.bf16.msra.mxu0 %v325
  %356 = vmatpush.bf16.msra.mxu0 %v323
  %357 = vmatpush.bf16.msra.mxu0 %v321
  %358 = vmatmul.bf16.gmra.mxu0 %v339
  %v359 = vpop.f32.mrf.mxu0
  %v360 = vadd.f32 0.0, %v359
  %v361 = vpop.f32.mrf.mxu0
  %v362 = vadd.f32 0.0, %v361
  %363 = vmatmul.bf16.gmra.mxu0 %v342
  %v364 = vpop.f32.mrf.mxu0
  %v365 = vadd.f32 0.0, %v364
  %v366 = vpop.f32.mrf.mxu0
  %v367 = vadd.f32 0.0, %v366
  %368 = vmatmul.bf16.gmra.mxu0 %v345
  %v369 = vpop.f32.mrf.mxu0
  %v370 = vadd.f32 0.0, %v369
  %v371 = vpop.f32.mrf.mxu0
  %v372 = vadd.f32 0.0, %v371
  %373 = vmatmul.bf16.gmra.mxu0 %v348
  %v374 = vpop.f32.mrf.mxu0
  %v375 = vadd.f32 0.0, %v374
  %v376 = vpop.f32.mrf.mxu0
  %v377 = vadd.f32 0.0, %v376
  %378 = vdwg.mxu0
  %379 = vmatpush.bf16.msra.mxu0 0
  %380 = vmatpush.bf16.msra.mxu0 0
  %381 = vmatpush.bf16.msra.mxu0 0
  %382 = vmatpush.bf16.msra.mxu0 0
  %383 = vmatpush.bf16.msra.mxu0 %v328
  %384 = vmatpush.bf16.msra.mxu0 %v326
  %385 = vmatpush.bf16.msra.mxu0 %v324
  %386 = vmatpush.bf16.msra.mxu0 %v322
  %387 = vmatmul.bf16.gmra.mxu0 %v339
  %v388 = vpop.f32.mrf.mxu0
  %v389 = vadd.f32 0.0, %v388
  %v390 = vpop.f32.mrf.mxu0
  %v391 = vadd.f32 0.0, %v390
  %392 = vmatmul.bf16.gmra.mxu0 %v342
  %v393 = vpop.f32.mrf.mxu0
  %v394 = vadd.f32 0.0, %v393
  %v395 = vpop.f32.mrf.mxu0
  %v396 = vadd.f32 0.0, %v395
  %397 = vmatmul.bf16.gmra.mxu0 %v345
  %v398 = vpop.f32.mrf.mxu0
  %v399 = vadd.f32 0.0, %v398
  %v400 = vpop.f32.mrf.mxu0
  %v401 = vadd.f32 0.0, %v400
  %402 = vmatmul.bf16.gmra.mxu0 %v348
  %v403 = vpop.f32.mrf.mxu0
  %v404 = vadd.f32 0.0, %v403
  %v405 = vpop.f32.mrf.mxu0
  %v406 = vadd.f32 0.0, %v405
  %407 = vdwg.mxu0
  %v416 = vunpack.c.l.b16 %v280
  %v417 = vunpack.c.h.b16 %v280
  %v418 = vunpack.c.l.b16 %v281
  %v419 = vunpack.c.h.b16 %v281
  %v420 = vunpack.c.l.b16 %v282
  %v421 = vunpack.c.h.b16 %v282
  %v422 = vunpack.c.l.b16 %v283
  %v423 = vunpack.c.h.b16 %v283
  %v424 = vunpack.c.l.b16 %v284
  %v425 = vunpack.c.h.b16 %v284
  %v426 = vunpack.c.l.b16 %v285
  %v427 = vunpack.c.h.b16 %v285
  %v428 = vunpack.c.l.b16 %v286
  %v429 = vunpack.c.h.b16 %v286
  %v430 = vunpack.c.l.b16 %v287
  %v431 = vunpack.c.h.b16 %v287
  %v432 = vpack.c.b16 %v418, %v416
  %v433 = vpack.c.b16 %v419, %v417
  %v434 = vpack.c.b16 %v422, %v420
  %v435 = vpack.c.b16 %v423, %v421
  %v436 = vpack.c.b16 %v426, %v424
  %v437 = vpack.c.b16 %v427, %v425
  %v438 = vpack.c.b16 %v430, %v428
  %v439 = vpack.c.b16 %v431, %v429
  %v449 = vsel %vm337, %v128, 0
  %v452 = vsel %vm337, %v129, 0
  %v455 = vsel %vm337, %v130, 0
  %v458 = vsel %vm337, %v131, 0
  %460 = vmatpush.bf16.msra.mxu0 0
  %461 = vmatpush.bf16.msra.mxu0 0
  %462 = vmatpush.bf16.msra.mxu0 0
  %463 = vmatpush.bf16.msra.mxu0 0
  %464 = vmatpush.bf16.msra.mxu0 %v438
  %465 = vmatpush.bf16.msra.mxu0 %v436
  %466 = vmatpush.bf16.msra.mxu0 %v434
  %467 = vmatpush.bf16.msra.mxu0 %v432
  %468 = vmatmul.bf16.gmra.mxu0 %v449
  %v469 = vpop.f32.mrf.mxu0
  %v470 = vadd.f32 %v360, %v469
  %v471 = vpop.f32.mrf.mxu0
  %v472 = vadd.f32 %v362, %v471
  %473 = vmatmul.bf16.gmra.mxu0 %v452
  %v474 = vpop.f32.mrf.mxu0
  %v475 = vadd.f32 %v365, %v474
  %v476 = vpop.f32.mrf.mxu0
  %v477 = vadd.f32 %v367, %v476
  %478 = vmatmul.bf16.gmra.mxu0 %v455
  %v479 = vpop.f32.mrf.mxu0
  %v480 = vadd.f32 %v370, %v479
  %v481 = vpop.f32.mrf.mxu0
  %v482 = vadd.f32 %v372, %v481
  %483 = vmatmul.bf16.gmra.mxu0 %v458
  %v484 = vpop.f32.mrf.mxu0
  %v485 = vadd.f32 %v375, %v484
  %v486 = vpop.f32.mrf.mxu0
  %v487 = vadd.f32 %v377, %v486
  %488 = vdwg.mxu0
  %489 = vmatpush.bf16.msra.mxu0 0
  %490 = vmatpush.bf16.msra.mxu0 0
  %491 = vmatpush.bf16.msra.mxu0 0
  %492 = vmatpush.bf16.msra.mxu0 0
  %493 = vmatpush.bf16.msra.mxu0 %v439
  %494 = vmatpush.bf16.msra.mxu0 %v437
  %495 = vmatpush.bf16.msra.mxu0 %v435
  %496 = vmatpush.bf16.msra.mxu0 %v433
  %497 = vmatmul.bf16.gmra.mxu0 %v449
  %v498 = vpop.f32.mrf.mxu0
  %v499 = vadd.f32 %v389, %v498
  %v500 = vpop.f32.mrf.mxu0
  %v501 = vadd.f32 %v391, %v500
  %502 = vmatmul.bf16.gmra.mxu0 %v452
  %v503 = vpop.f32.mrf.mxu0
  %v504 = vadd.f32 %v394, %v503
  %v505 = vpop.f32.mrf.mxu0
  %v506 = vadd.f32 %v396, %v505
  %507 = vmatmul.bf16.gmra.mxu0 %v455
  %v508 = vpop.f32.mrf.mxu0
  %v509 = vadd.f32 %v399, %v508
  %v510 = vpop.f32.mrf.mxu0
  %v511 = vadd.f32 %v401, %v510
  %512 = vmatmul.bf16.gmra.mxu0 %v458
  %v513 = vpop.f32.mrf.mxu0
  %v514 = vadd.f32 %v404, %v513
  %v515 = vpop.f32.mrf.mxu0
  %v516 = vadd.f32 %v406, %v515
  %517 = vdwg.mxu0
  %s518 = scalar_lea.vmem %s2, 128
  %v519 = vld [vmem:[%s518] sm:$0xff]
  %v520 = vld [vmem:[%s518 + $0x8] sm:$0xff]
  %v521 = vld [vmem:[%s518 + $0x10] sm:$0xff]
  %v522 = vld [vmem:[%s518 + $0x18] sm:$0xff]
  %v523 = vld [vmem:[%s518 + $0x20] sm:$0xff]
  %v524 = vld [vmem:[%s518 + $0x28] sm:$0xff]
  %v525 = vld [vmem:[%s518 + $0x30] sm:$0xff]
  %v526 = vld [vmem:[%s518 + $0x38] sm:$0xff]
  %v535 = vunpack.c.l.b16 %v519
  %v536 = vunpack.c.h.b16 %v519
  %v537 = vunpack.c.l.b16 %v520
  %v538 = vunpack.c.h.b16 %v520
  %v539 = vunpack.c.l.b16 %v521
  %v540 = vunpack.c.h.b16 %v521
  %v541 = vunpack.c.l.b16 %v522
  %v542 = vunpack.c.h.b16 %v522
  %v543 = vunpack.c.l.b16 %v523
  %v544 = vunpack.c.h.b16 %v523
  %v545 = vunpack.c.l.b16 %v524
  %v546 = vunpack.c.h.b16 %v524
  %v547 = vunpack.c.l.b16 %v525
  %v548 = vunpack.c.h.b16 %v525
  %v549 = vunpack.c.l.b16 %v526
  %v550 = vunpack.c.h.b16 %v526
  %v551 = vpack.c.b16 %v537, %v535
  %v552 = vpack.c.b16 %v538, %v536
  %v553 = vpack.c.b16 %v541, %v539
  %v554 = vpack.c.b16 %v542, %v540
  %v555 = vpack.c.b16 %v545, %v543
  %v556 = vpack.c.b16 %v546, %v544
  %v557 = vpack.c.b16 %v549, %v547
  %v558 = vpack.c.b16 %v550, %v548
  %v568 = vsel %vm337, %v276, 0
  %v571 = vsel %vm337, %v277, 0
  %v574 = vsel %vm337, %v278, 0
  %v577 = vsel %vm337, %v279, 0
  %579 = vmatpush.bf16.msra.mxu0 0
  %580 = vmatpush.bf16.msra.mxu0 0
  %581 = vmatpush.bf16.msra.mxu0 0
  %582 = vmatpush.bf16.msra.mxu0 0
  %583 = vmatpush.bf16.msra.mxu0 %v557
  %584 = vmatpush.bf16.msra.mxu0 %v555
  %585 = vmatpush.bf16.msra.mxu0 %v553
  %586 = vmatpush.bf16.msra.mxu0 %v551
  %587 = vmatmul.bf16.gmra.mxu0 %v568
  %v588 = vpop.f32.mrf.mxu0
  %v589 = vadd.f32 0.0, %v588
  %v590 = vpop.f32.mrf.mxu0
  %v591 = vadd.f32 0.0, %v590
  %592 = vmatmul.bf16.gmra.mxu0 %v571
  %v593 = vpop.f32.mrf.mxu0
  %v594 = vadd.f32 0.0, %v593
  %v595 = vpop.f32.mrf.mxu0
  %v596 = vadd.f32 0.0, %v595
  %597 = vmatmul.bf16.gmra.mxu0 %v574
  %v598 = vpop.f32.mrf.mxu0
  %v599 = vadd.f32 0.0, %v598
  %v600 = vpop.f32.mrf.mxu0
  %v601 = vadd.f32 0.0, %v600
  %602 = vmatmul.bf16.gmra.mxu0 %v577
  %v603 = vpop.f32.mrf.mxu0
  %v604 = vadd.f32 0.0, %v603
  %v605 = vpop.f32.mrf.mxu0
  %v606 = vadd.f32 0.0, %v605
  %607 = vdwg.mxu0
  %608 = vmatpush.bf16.msra.mxu0 0
  %609 = vmatpush.bf16.msra.mxu0 0
  %610 = vmatpush.bf16.msra.mxu0 0
  %611 = vmatpush.bf16.msra.mxu0 0
  %612 = vmatpush.bf16.msra.mxu0 %v558
  %613 = vmatpush.bf16.msra.mxu0 %v556
  %614 = vmatpush.bf16.msra.mxu0 %v554
  %615 = vmatpush.bf16.msra.mxu0 %v552
  %616 = vmatmul.bf16.gmra.mxu0 %v568
  %v617 = vpop.f32.mrf.mxu0
  %v618 = vadd.f32 0.0, %v617
  %v619 = vpop.f32.mrf.mxu0
  %v620 = vadd.f32 0.0, %v619
  %621 = vmatmul.bf16.gmra.mxu0 %v571
  %v622 = vpop.f32.mrf.mxu0
  %v623 = vadd.f32 0.0, %v622
  %v624 = vpop.f32.mrf.mxu0
  %v625 = vadd.f32 0.0, %v624
  %626 = vmatmul.bf16.gmra.mxu0 %v574
  %v627 = vpop.f32.mrf.mxu0
  %v628 = vadd.f32 0.0, %v627
  %v629 = vpop.f32.mrf.mxu0
  %v630 = vadd.f32 0.0, %v629
  %631 = vmatmul.bf16.gmra.mxu0 %v577
  %v632 = vpop.f32.mrf.mxu0
  %v633 = vadd.f32 0.0, %v632
  %v634 = vpop.f32.mrf.mxu0
  %v635 = vadd.f32 0.0, %v634
  %636 = vdwg.mxu0
  %v637 = vadd.f32 %v470, %v589
  %v638 = vadd.f32 %v499, %v618
  %v639 = vadd.f32 %v472, %v591
  %v640 = vadd.f32 %v501, %v620
  %v641 = vadd.f32 %v475, %v594
  %v642 = vadd.f32 %v504, %v623
  %v643 = vadd.f32 %v477, %v596
  %v644 = vadd.f32 %v506, %v625
  %v645 = vadd.f32 %v480, %v599
  %v646 = vadd.f32 %v509, %v628
  %v647 = vadd.f32 %v482, %v601
  %v648 = vadd.f32 %v511, %v630
  %v649 = vadd.f32 %v485, %v604
  %v650 = vadd.f32 %v514, %v633
  %v651 = vadd.f32 %v487, %v606
  %v652 = vadd.f32 %v516, %v635
  %v653 = vadd.f32 %v637, %v639
  %v654 = vadd.f32 %v653, %v641
  %v655 = vadd.f32 %v654, %v643
  %v656 = vadd.f32 %v655, %v645
  %v657 = vadd.f32 %v656, %v647
  %v658 = vadd.f32 %v657, %v649
  %v659 = vadd.f32 %v658, %v651
  %v660 = vadd.f32 %v638, %v640
  %v661 = vadd.f32 %v660, %v642
  %v662 = vadd.f32 %v661, %v644
  %v663 = vadd.f32 %v662, %v646
  %v664 = vadd.f32 %v663, %v648
  %v665 = vadd.f32 %v664, %v650
  %v666 = vadd.f32 %v665, %v652
  %v667 = vld [vmem:[%s6] sm:$0xff]
  %v668 = vld [vmem:[%s6 + $0x8] sm:$0xff]
  %v669 = vld [vmem:[%s6 + $0x10] sm:$0xff]
  %v670 = vld [vmem:[%s6 + $0x18] sm:$0xff]
  %v671 = vld [vmem:[%s6 + $0x20] sm:$0xff]
  %v672 = vld [vmem:[%s6 + $0x28] sm:$0xff]
  %v673 = vld [vmem:[%s6 + $0x30] sm:$0xff]
  %v674 = vld [vmem:[%s6 + $0x38] sm:$0xff]
  %v675 = vld [vmem:[%s6 + $0x40] sm:$0xff]
  %v676 = vld [vmem:[%s6 + $0x48] sm:$0xff]
  %v677 = vld [vmem:[%s6 + $0x50] sm:$0xff]
  %v678 = vld [vmem:[%s6 + $0x58] sm:$0xff]
  %v679 = vld [vmem:[%s6 + $0x60] sm:$0xff]
  %v680 = vld [vmem:[%s6 + $0x68] sm:$0xff]
  %v681 = vld [vmem:[%s6 + $0x70] sm:$0xff]
  %v682 = vld [vmem:[%s6 + $0x78] sm:$0xff]
  %v683 = vld [vmem:[%s6 + $0x80] sm:$0xff]
  %v684 = vld [vmem:[%s6 + $0x88] sm:$0xff]
  %v685 = vld [vmem:[%s6 + $0x90] sm:$0xff]
  %v686 = vld [vmem:[%s6 + $0x98] sm:$0xff]
  %v687 = vld [vmem:[%s6 + $0xa0] sm:$0xff]
  %v688 = vld [vmem:[%s6 + $0xa8] sm:$0xff]
  %v689 = vld [vmem:[%s6 + $0xb0] sm:$0xff]
  %v690 = vld [vmem:[%s6 + $0xb8] sm:$0xff]
  %v691 = vld [vmem:[%s6 + $0xc0] sm:$0xff]
  %v692 = vld [vmem:[%s6 + $0xc8] sm:$0xff]
  %v693 = vld [vmem:[%s6 + $0xd0] sm:$0xff]
  %v694 = vld [vmem:[%s6 + $0xd8] sm:$0xff]
  %v695 = vld [vmem:[%s6 + $0xe0] sm:$0xff]
  %v696 = vld [vmem:[%s6 + $0xe8] sm:$0xff]
  %v697 = vld [vmem:[%s6 + $0xf0] sm:$0xff]
  %v698 = vld [vmem:[%s6 + $0xf8] sm:$0xff]
  %v699 = vld [vmem:[%s6 + $0x100] sm:$0xff]
  %v700 = vld [vmem:[%s6 + $0x108] sm:$0xff]
  %v701 = vld [vmem:[%s6 + $0x110] sm:$0xff]
  %v702 = vld [vmem:[%s6 + $0x118] sm:$0xff]
  %v703 = vld [vmem:[%s6 + $0x120] sm:$0xff]
  %v704 = vld [vmem:[%s6 + $0x128] sm:$0xff]
  %v705 = vld [vmem:[%s6 + $0x130] sm:$0xff]
  %v706 = vld [vmem:[%s6 + $0x138] sm:$0xff]
  %v707 = vld [vmem:[%s6 + $0x140] sm:$0xff]
  %v708 = vld [vmem:[%s6 + $0x148] sm:$0xff]
  %v709 = vld [vmem:[%s6 + $0x150] sm:$0xff]
  %v710 = vld [vmem:[%s6 + $0x158] sm:$0xff]
  %v711 = vld [vmem:[%s6 + $0x160] sm:$0xff]
  %v712 = vld [vmem:[%s6 + $0x168] sm:$0xff]
  %v713 = vld [vmem:[%s6 + $0x170] sm:$0xff]
  %v714 = vld [vmem:[%s6 + $0x178] sm:$0xff]
  %v715 = vld [vmem:[%s6 + $0x180] sm:$0xff]
  %v716 = vld [vmem:[%s6 + $0x188] sm:$0xff]
  %v717 = vld [vmem:[%s6 + $0x190] sm:$0xff]
  %v718 = vld [vmem:[%s6 + $0x198] sm:$0xff]
  %v719 = vld [vmem:[%s6 + $0x1a0] sm:$0xff]
  %v720 = vld [vmem:[%s6 + $0x1a8] sm:$0xff]
  %v721 = vld [vmem:[%s6 + $0x1b0] sm:$0xff]
  %v722 = vld [vmem:[%s6 + $0x1b8] sm:$0xff]
  %v723 = vld [vmem:[%s6 + $0x1c0] sm:$0xff]
  %v724 = vld [vmem:[%s6 + $0x1c8] sm:$0xff]
  %v725 = vld [vmem:[%s6 + $0x1d0] sm:$0xff]
  %v726 = vld [vmem:[%s6 + $0x1d8] sm:$0xff]
  %v727 = vld [vmem:[%s6 + $0x1e0] sm:$0xff]
  %v728 = vld [vmem:[%s6 + $0x1e8] sm:$0xff]
  %v729 = vld [vmem:[%s6 + $0x1f0] sm:$0xff]
  %v730 = vld [vmem:[%s6 + $0x1f8] sm:$0xff]
  %731 = vmatpush.msra.mxu0 %v697
  %732 = vmatpush.msra.mxu0 %v695
  %733 = vmatpush.msra.mxu0 %v693
  %734 = vmatpush.msra.mxu0 %v691
  %735 = vmatpush.msra.mxu0 %v689
  %736 = vmatpush.msra.mxu0 %v687
  %737 = vmatpush.msra.mxu0 %v685
  %738 = vmatpush.msra.mxu0 %v683
  %739 = vmatpush.msra.mxu0 %v681
  %740 = vmatpush.msra.mxu0 %v679
  %741 = vmatpush.msra.mxu0 %v677
  %742 = vmatpush.msra.mxu0 %v675
  %743 = vmatpush.msra.mxu0 %v673
  %744 = vmatpush.msra.mxu0 %v671
  %745 = vmatpush.msra.mxu0 %v669
  %746 = vmatpush.msra.mxu0 %v667
  %747 = vmatmul.f32.gmra.mxu0 %v659
  %v748 = vpop.f32.mrf.mxu0
  %v749 = vadd.f32 0.0, %v748
  %750 = vdwg.mxu0
  %751 = vmatpush.msra.mxu0 %v729
  %752 = vmatpush.msra.mxu0 %v727
  %753 = vmatpush.msra.mxu0 %v725
  %754 = vmatpush.msra.mxu0 %v723
  %755 = vmatpush.msra.mxu0 %v721
  %756 = vmatpush.msra.mxu0 %v719
  %757 = vmatpush.msra.mxu0 %v717
  %758 = vmatpush.msra.mxu0 %v715
  %759 = vmatpush.msra.mxu0 %v713
  %760 = vmatpush.msra.mxu0 %v711
  %761 = vmatpush.msra.mxu0 %v709
  %762 = vmatpush.msra.mxu0 %v707
  %763 = vmatpush.msra.mxu0 %v705
  %764 = vmatpush.msra.mxu0 %v703
  %765 = vmatpush.msra.mxu0 %v701
  %766 = vmatpush.msra.mxu0 %v699
  %767 = vmatmul.f32.gmra.mxu0 %v666
  %v768 = vpop.f32.mrf.mxu0
  %v769 = vadd.f32 %v749, %v768
  %770 = vdwg.mxu0
  %771 = vmatpush.msra.mxu0 %v698
  %772 = vmatpush.msra.mxu0 %v696
  %773 = vmatpush.msra.mxu0 %v694
  %774 = vmatpush.msra.mxu0 %v692
  %775 = vmatpush.msra.mxu0 %v690
  %776 = vmatpush.msra.mxu0 %v688
  %777 = vmatpush.msra.mxu0 %v686
  %778 = vmatpush.msra.mxu0 %v684
  %779 = vmatpush.msra.mxu0 %v682
  %780 = vmatpush.msra.mxu0 %v680
  %781 = vmatpush.msra.mxu0 %v678
  %782 = vmatpush.msra.mxu0 %v676
  %783 = vmatpush.msra.mxu0 %v674
  %784 = vmatpush.msra.mxu0 %v672
  %785 = vmatpush.msra.mxu0 %v670
  %786 = vmatpush.msra.mxu0 %v668
  %787 = vmatmul.f32.gmra.mxu0 %v659
  %v788 = vpop.f32.mrf.mxu0
  %v789 = vadd.f32 0.0, %v788
  %790 = vdwg.mxu0
  %791 = vmatpush.msra.mxu0 %v730
  %792 = vmatpush.msra.mxu0 %v728
  %793 = vmatpush.msra.mxu0 %v726
  %794 = vmatpush.msra.mxu0 %v724
  %795 = vmatpush.msra.mxu0 %v722
  %796 = vmatpush.msra.mxu0 %v720
  %797 = vmatpush.msra.mxu0 %v718
  %798 = vmatpush.msra.mxu0 %v716
  %799 = vmatpush.msra.mxu0 %v714
  %800 = vmatpush.msra.mxu0 %v712
  %801 = vmatpush.msra.mxu0 %v710
  %802 = vmatpush.msra.mxu0 %v708
  %803 = vmatpush.msra.mxu0 %v706
  %804 = vmatpush.msra.mxu0 %v704
  %805 = vmatpush.msra.mxu0 %v702
  %806 = vmatpush.msra.mxu0 %v700
  %807 = vmatmul.f32.gmra.mxu0 %v666
  %v808 = vpop.f32.mrf.mxu0
  %v809 = vadd.f32 %v789, %v808
  %810 = vdwg.mxu0
  %v811 = vrot.slane %v769, 4
  %v812 = vadd.f32 %v769, %v811
  %v813 = vrot.slane %v812, 2
  %v814 = vadd.f32 %v812, %v813
  %v815 = vrot.slane %v814, 1
  %v816 = vadd.f32 %v814, %v815
  %v817 = vrot.slane %v809, 4
  %v818 = vadd.f32 %v809, %v817
  %v819 = vrot.slane %v818, 2
  %v820 = vadd.f32 %v818, %v819
  %v821 = vrot.slane %v820, 1
  %v822 = vadd.f32 %v820, %v821
  %v823 = vmul.f32 %v816, 0.00048828125
  %v824 = vmul.f32 %v822, 0.00048828125
  %v825 = vsub.f32 %v637, %v823
  %v826 = vsub.f32 %v638, %v824
  %v827 = vsub.f32 %v639, %v823
  %v828 = vsub.f32 %v640, %v824
  %v829 = vsub.f32 %v641, %v823
  %v830 = vsub.f32 %v642, %v824
  %v831 = vsub.f32 %v643, %v823
  %v832 = vsub.f32 %v644, %v824
  %v833 = vsub.f32 %v645, %v823
  %v834 = vsub.f32 %v646, %v824
  %v835 = vsub.f32 %v647, %v823
  %v836 = vsub.f32 %v648, %v824
  %v837 = vsub.f32 %v649, %v823
  %v838 = vsub.f32 %v650, %v824
  %v839 = vsub.f32 %v651, %v823
  %v840 = vsub.f32 %v652, %v824
  %v841 = vmul.f32 %v825, %v825
  %v842 = vmul.f32 %v826, %v826
  %v843 = vmul.f32 %v827, %v827
  %v844 = vmul.f32 %v828, %v828
  %v845 = vmul.f32 %v829, %v829
  %v846 = vmul.f32 %v830, %v830
  %v847 = vmul.f32 %v831, %v831
  %v848 = vmul.f32 %v832, %v832
  %v849 = vmul.f32 %v833, %v833
  %v850 = vmul.f32 %v834, %v834
  %v851 = vmul.f32 %v835, %v835
  %v852 = vmul.f32 %v836, %v836
  %v853 = vmul.f32 %v837, %v837
  %v854 = vmul.f32 %v838, %v838
  %v855 = vmul.f32 %v839, %v839
  %v856 = vmul.f32 %v840, %v840
  %v857 = vadd.f32 %v841, %v843
  %v858 = vadd.f32 %v857, %v845
  %v859 = vadd.f32 %v858, %v847
  %v860 = vadd.f32 %v859, %v849
  %v861 = vadd.f32 %v860, %v851
  %v862 = vadd.f32 %v861, %v853
  %v863 = vadd.f32 %v862, %v855
  %v864 = vadd.f32 %v842, %v844
  %v865 = vadd.f32 %v864, %v846
  %v866 = vadd.f32 %v865, %v848
  %v867 = vadd.f32 %v866, %v850
  %v868 = vadd.f32 %v867, %v852
  %v869 = vadd.f32 %v868, %v854
  %v870 = vadd.f32 %v869, %v856
  %871 = vmatpush.msra.mxu0 %v697
  %872 = vmatpush.msra.mxu0 %v695
  %873 = vmatpush.msra.mxu0 %v693
  %874 = vmatpush.msra.mxu0 %v691
  %875 = vmatpush.msra.mxu0 %v689
  %876 = vmatpush.msra.mxu0 %v687
  %877 = vmatpush.msra.mxu0 %v685
  %878 = vmatpush.msra.mxu0 %v683
  %879 = vmatpush.msra.mxu0 %v681
  %880 = vmatpush.msra.mxu0 %v679
  %881 = vmatpush.msra.mxu0 %v677
  %882 = vmatpush.msra.mxu0 %v675
  %883 = vmatpush.msra.mxu0 %v673
  %884 = vmatpush.msra.mxu0 %v671
  %885 = vmatpush.msra.mxu0 %v669
  %886 = vmatpush.msra.mxu0 %v667
  %887 = vmatmul.f32.gmra.mxu0 %v863
  %v888 = vpop.f32.mrf.mxu0
  %v889 = vadd.f32 0.0, %v888
  %890 = vdwg.mxu0
  %891 = vmatpush.msra.mxu0 %v729
  %892 = vmatpush.msra.mxu0 %v727
  %893 = vmatpush.msra.mxu0 %v725
  %894 = vmatpush.msra.mxu0 %v723
  %895 = vmatpush.msra.mxu0 %v721
  %896 = vmatpush.msra.mxu0 %v719
  %897 = vmatpush.msra.mxu0 %v717
  %898 = vmatpush.msra.mxu0 %v715
  %899 = vmatpush.msra.mxu0 %v713
  %900 = vmatpush.msra.mxu0 %v711
  %901 = vmatpush.msra.mxu0 %v709
  %902 = vmatpush.msra.mxu0 %v707
  %903 = vmatpush.msra.mxu0 %v705
  %904 = vmatpush.msra.mxu0 %v703
  %905 = vmatpush.msra.mxu0 %v701
  %906 = vmatpush.msra.mxu0 %v699
  %907 = vmatmul.f32.gmra.mxu0 %v870
  %v908 = vpop.f32.mrf.mxu0
  %v909 = vadd.f32 %v889, %v908
  %910 = vdwg.mxu0
  %911 = vmatpush.msra.mxu0 %v698
  %912 = vmatpush.msra.mxu0 %v696
  %913 = vmatpush.msra.mxu0 %v694
  %914 = vmatpush.msra.mxu0 %v692
  %915 = vmatpush.msra.mxu0 %v690
  %916 = vmatpush.msra.mxu0 %v688
  %917 = vmatpush.msra.mxu0 %v686
  %918 = vmatpush.msra.mxu0 %v684
  %919 = vmatpush.msra.mxu0 %v682
  %920 = vmatpush.msra.mxu0 %v680
  %921 = vmatpush.msra.mxu0 %v678
  %922 = vmatpush.msra.mxu0 %v676
  %923 = vmatpush.msra.mxu0 %v674
  %924 = vmatpush.msra.mxu0 %v672
  %925 = vmatpush.msra.mxu0 %v670
  %926 = vmatpush.msra.mxu0 %v668
  %927 = vmatmul.f32.gmra.mxu0 %v863
  %v928 = vpop.f32.mrf.mxu0
  %v929 = vadd.f32 0.0, %v928
  %930 = vdwg.mxu0
  %931 = vmatpush.msra.mxu0 %v730
  %932 = vmatpush.msra.mxu0 %v728
  %933 = vmatpush.msra.mxu0 %v726
  %934 = vmatpush.msra.mxu0 %v724
  %935 = vmatpush.msra.mxu0 %v722
  %936 = vmatpush.msra.mxu0 %v720
  %937 = vmatpush.msra.mxu0 %v718
  %938 = vmatpush.msra.mxu0 %v716
  %939 = vmatpush.msra.mxu0 %v714
  %940 = vmatpush.msra.mxu0 %v712
  %941 = vmatpush.msra.mxu0 %v710
  %942 = vmatpush.msra.mxu0 %v708
  %943 = vmatpush.msra.mxu0 %v706
  %944 = vmatpush.msra.mxu0 %v704
  %945 = vmatpush.msra.mxu0 %v702
  %946 = vmatpush.msra.mxu0 %v700
  %947 = vmatmul.f32.gmra.mxu0 %v870
  %v948 = vpop.f32.mrf.mxu0
  %v949 = vadd.f32 %v929, %v948
  %950 = vdwg.mxu0
  %v951 = vrot.slane %v909, 4
  %v952 = vadd.f32 %v909, %v951
  %v953 = vrot.slane %v952, 2
  %v954 = vadd.f32 %v952, %v953
  %v955 = vrot.slane %v954, 1
  %v956 = vadd.f32 %v954, %v955
  %v957 = vrot.slane %v949, 4
  %v958 = vadd.f32 %v949, %v957
  %v959 = vrot.slane %v958, 2
  %v960 = vadd.f32 %v958, %v959
  %v961 = vrot.slane %v960, 1
  %v962 = vadd.f32 %v960, %v961
  %v963 = vmul.f32 %v956, 0.00048828125
  %v964 = vmul.f32 %v962, 0.00048828125
  %v965 = vld [vmem:[%s8] sm:$0x3]
  %v966 = vadd.f32 %v963, 1e-05
  %v967 = vadd.f32 %v964, 1e-05
  %v968 = vrsqrt.pop %v966
  %v969 = vmul.f32 %v968, %v966
  %v970 = vmul.f32 %v969, %v968
  %v971 = vmul.f32 0.5, %v970
  %v972 = vsub.f32 1.5, %v971
  %v973 = vmul.f32 %v968, %v972
  %vm974 = vweird.f32 %v966
  %vm975 = vweird.f32 %v968
  %vm976 = vmor %vm974, %vm975
  %v977 = vsel %vm976, %v968, %v973
  %v978 = vrsqrt.pop %v967
  %v979 = vmul.f32 %v978, %v967
  %v980 = vmul.f32 %v979, %v978
  %v981 = vmul.f32 0.5, %v980
  %v982 = vsub.f32 1.5, %v981
  %v983 = vmul.f32 %v978, %v982
  %vm984 = vweird.f32 %v967
  %vm985 = vweird.f32 %v978
  %vm986 = vmor %vm984, %vm985
  %v987 = vsel %vm986, %v978, %v983
  %v990 = vrot.slane %v987, 7
  %vm991 = vcmask 1040384
  %v992 = vsel %vm991, %v977, %v990
  %v994 = vmul.f32 %v965, %v992
  %v996 = vperm.slane %v994, 0
  %v997 = vperm.slane %v994, 1
  %v1000 = vmul.f32 %v825, %v996
  %v1001 = vmul.f32 %v826, %v997
  %v1002 = vmul.f32 %v827, %v996
  %v1003 = vmul.f32 %v828, %v997
  %v1004 = vmul.f32 %v829, %v996
  %v1005 = vmul.f32 %v830, %v997
  %v1006 = vmul.f32 %v831, %v996
  %v1007 = vmul.f32 %v832, %v997
  %v1008 = vmul.f32 %v833, %v996
  %v1009 = vmul.f32 %v834, %v997
  %v1010 = vmul.f32 %v835, %v996
  %v1011 = vmul.f32 %v836, %v997
  %v1012 = vmul.f32 %v837, %v996
  %v1013 = vmul.f32 %v838, %v997
  %v1014 = vmul.f32 %v839, %v996
  %v1015 = vmul.f32 %v840, %v997
  %v1016 = vld [vmem:[%s9] sm:$0x3]
  %v1018 = vperm.slane %v1016, 0
  %v1019 = vperm.slane %v1016, 1
  %v1022 = vadd.f32 %v1000, %v1018
  %v1023 = vadd.f32 %v1001, %v1019
  %v1024 = vadd.f32 %v1002, %v1018
  %v1025 = vadd.f32 %v1003, %v1019
  %v1026 = vadd.f32 %v1004, %v1018
  %v1027 = vadd.f32 %v1005, %v1019
  %v1028 = vadd.f32 %v1006, %v1018
  %v1029 = vadd.f32 %v1007, %v1019
  %v1030 = vadd.f32 %v1008, %v1018
  %v1031 = vadd.f32 %v1009, %v1019
  %v1032 = vadd.f32 %v1010, %v1018
  %v1033 = vadd.f32 %v1011, %v1019
  %v1034 = vadd.f32 %v1012, %v1018
  %v1035 = vadd.f32 %v1013, %v1019
  %v1036 = vadd.f32 %v1014, %v1018
  %v1037 = vadd.f32 %v1015, %v1019
  %v1038 = vmax.f32 %v1022, 0.0
  %v1039 = vmax.f32 %v1023, 0.0
  %v1040 = vmax.f32 %v1024, 0.0
  %v1041 = vmax.f32 %v1025, 0.0
  %v1042 = vmax.f32 %v1026, 0.0
  %v1043 = vmax.f32 %v1027, 0.0
  %v1044 = vmax.f32 %v1028, 0.0
  %v1045 = vmax.f32 %v1029, 0.0
  %v1046 = vmax.f32 %v1030, 0.0
  %v1047 = vmax.f32 %v1031, 0.0
  %v1048 = vmax.f32 %v1032, 0.0
  %v1049 = vmax.f32 %v1033, 0.0
  %v1050 = vmax.f32 %v1034, 0.0
  %v1051 = vmax.f32 %v1035, 0.0
  %v1052 = vmax.f32 %v1036, 0.0
  %v1053 = vmax.f32 %v1037, 0.0
  %v1054 = vpack.c.bf16 %v1040, %v1038
  %v1055 = vpack.c.bf16 %v1041, %v1039
  %v1056 = vpack.c.bf16 %v1044, %v1042
  %v1057 = vpack.c.bf16 %v1045, %v1043
  %v1058 = vpack.c.bf16 %v1048, %v1046
  %v1059 = vpack.c.bf16 %v1049, %v1047
  %v1060 = vpack.c.bf16 %v1052, %v1050
  %v1061 = vpack.c.bf16 %v1053, %v1051
  %s1062 = scalar_lea.vmem %s5, 128
  %v1063 = vld [vmem:[%s1062] sm:$0xf]
  %v1064 = vld [vmem:[%s1062 + $0x4] sm:$0xf]
  %v1065 = vld [vmem:[%s1062 + $0x8] sm:$0xf]
  %v1066 = vld [vmem:[%s1062 + $0xc] sm:$0xf]
  %v1067 = vld [vmem:[%s1062 + $0x10] sm:$0xf]
  %v1068 = vld [vmem:[%s1062 + $0x14] sm:$0xf]
  %v1069 = vld [vmem:[%s1062 + $0x18] sm:$0xf]
  %v1070 = vld [vmem:[%s1062 + $0x1c] sm:$0xf]
  %v1071 = vld [vmem:[%s1062 + $0x20] sm:$0xf]
  %v1072 = vld [vmem:[%s1062 + $0x24] sm:$0xf]
  %v1073 = vld [vmem:[%s1062 + $0x28] sm:$0xf]
  %v1074 = vld [vmem:[%s1062 + $0x2c] sm:$0xf]
  %v1075 = vld [vmem:[%s1062 + $0x30] sm:$0xf]
  %v1076 = vld [vmem:[%s1062 + $0x34] sm:$0xf]
  %v1077 = vld [vmem:[%s1062 + $0x38] sm:$0xf]
  %v1078 = vld [vmem:[%s1062 + $0x3c] sm:$0xf]
  %v1079 = vld [vmem:[%s1062 + $0x40] sm:$0xf]
  %v1080 = vld [vmem:[%s1062 + $0x44] sm:$0xf]
  %v1081 = vld [vmem:[%s1062 + $0x48] sm:$0xf]
  %v1082 = vld [vmem:[%s1062 + $0x4c] sm:$0xf]
  %v1083 = vld [vmem:[%s1062 + $0x50] sm:$0xf]
  %v1084 = vld [vmem:[%s1062 + $0x54] sm:$0xf]
  %v1085 = vld [vmem:[%s1062 + $0x58] sm:$0xf]
  %v1086 = vld [vmem:[%s1062 + $0x5c] sm:$0xf]
  %v1087 = vld [vmem:[%s1062 + $0x60] sm:$0xf]
  %v1088 = vld [vmem:[%s1062 + $0x64] sm:$0xf]
  %v1089 = vld [vmem:[%s1062 + $0x68] sm:$0xf]
  %v1090 = vld [vmem:[%s1062 + $0x6c] sm:$0xf]
  %v1091 = vld [vmem:[%s1062 + $0x70] sm:$0xf]
  %v1092 = vld [vmem:[%s1062 + $0x74] sm:$0xf]
  %v1093 = vld [vmem:[%s1062 + $0x78] sm:$0xf]
  %v1094 = vld [vmem:[%s1062 + $0x7c] sm:$0xf]
  %v1095 = vld [vmem:[%s4] sm:$0xf]
  %v1096 = vld [vmem:[%s4 + $0x4] sm:$0xf]
  %v1097 = vld [vmem:[%s4 + $0x8] sm:$0xf]
  %v1098 = vld [vmem:[%s4 + $0xc] sm:$0xf]
  %v1099 = vld [vmem:[%s4 + $0x10] sm:$0xf]
  %v1100 = vld [vmem:[%s4 + $0x14] sm:$0xf]
  %v1101 = vld [vmem:[%s4 + $0x18] sm:$0xf]
  %v1102 = vld [vmem:[%s4 + $0x1c] sm:$0xf]
  %v1111 = vunpack.c.l.b16 %v1095
  %v1112 = vunpack.c.l.b16 %v1096
  %v1113 = vunpack.c.l.b16 %v1097
  %v1114 = vunpack.c.l.b16 %v1098
  %v1115 = vunpack.c.l.b16 %v1099
  %v1116 = vunpack.c.l.b16 %v1100
  %v1117 = vunpack.c.l.b16 %v1101
  %v1118 = vunpack.c.l.b16 %v1102
  %v1119 = vpack.c.b16 %v1112, %v1111
  %v1120 = vpack.c.b16 %v1114, %v1113
  %v1121 = vpack.c.b16 %v1116, %v1115
  %v1122 = vpack.c.b16 %v1118, %v1117
  %v1124 = vsel %vm337, %v1119, 0
  %v1127 = vsel %vm337, %v1120, 0
  %v1130 = vsel %vm337, %v1121, 0
  %v1133 = vsel %vm337, %v1122, 0
  %1135 = vmatpush.bf16.msra.mxu0 0
  %1136 = vmatpush.bf16.msra.mxu0 0
  %1137 = vmatpush.bf16.msra.mxu0 0
  %1138 = vmatpush.bf16.msra.mxu0 0
  %1139 = vmatpush.bf16.msra.mxu0 %v1060
  %1140 = vmatpush.bf16.msra.mxu0 %v1058
  %1141 = vmatpush.bf16.msra.mxu0 %v1056
  %1142 = vmatpush.bf16.msra.mxu0 %v1054
  %1143 = vmatmul.bf16.gmra.mxu0 %v1124
  %v1144 = vpop.f32.mrf.mxu0
  %v1145 = vadd.f32 0.0, %v1144
  %v1146 = vpop.f32.mrf.mxu0
  %v1147 = vadd.f32 0.0, %v1146
  %1148 = vmatmul.bf16.gmra.mxu0 %v1127
  %v1149 = vpop.f32.mrf.mxu0
  %v1150 = vadd.f32 0.0, %v1149
  %v1151 = vpop.f32.mrf.mxu0
  %v1152 = vadd.f32 0.0, %v1151
  %1153 = vmatmul.bf16.gmra.mxu0 %v1130
  %v1154 = vpop.f32.mrf.mxu0
  %v1155 = vadd.f32 0.0, %v1154
  %v1156 = vpop.f32.mrf.mxu0
  %v1157 = vadd.f32 0.0, %v1156
  %1158 = vmatmul.bf16.gmra.mxu0 %v1133
  %v1159 = vpop.f32.mrf.mxu0
  %v1160 = vadd.f32 0.0, %v1159
  %v1161 = vpop.f32.mrf.mxu0
  %v1162 = vadd.f32 0.0, %v1161
  %1163 = vdwg.mxu0
  %1164 = vmatpush.bf16.msra.mxu0 0
  %1165 = vmatpush.bf16.msra.mxu0 0
  %1166 = vmatpush.bf16.msra.mxu0 0
  %1167 = vmatpush.bf16.msra.mxu0 0
  %1168 = vmatpush.bf16.msra.mxu0 %v1061
  %1169 = vmatpush.bf16.msra.mxu0 %v1059
  %1170 = vmatpush.bf16.msra.mxu0 %v1057
  %1171 = vmatpush.bf16.msra.mxu0 %v1055
  %1172 = vmatmul.bf16.gmra.mxu0 %v1124
  %v1173 = vpop.f32.mrf.mxu0
  %v1174 = vadd.f32 0.0, %v1173
  %v1175 = vpop.f32.mrf.mxu0
  %v1176 = vadd.f32 0.0, %v1175
  %1177 = vmatmul.bf16.gmra.mxu0 %v1127
  %v1178 = vpop.f32.mrf.mxu0
  %v1179 = vadd.f32 0.0, %v1178
  %v1180 = vpop.f32.mrf.mxu0
  %v1181 = vadd.f32 0.0, %v1180
  %1182 = vmatmul.bf16.gmra.mxu0 %v1130
  %v1183 = vpop.f32.mrf.mxu0
  %v1184 = vadd.f32 0.0, %v1183
  %v1185 = vpop.f32.mrf.mxu0
  %v1186 = vadd.f32 0.0, %v1185
  %1187 = vmatmul.bf16.gmra.mxu0 %v1133
  %v1188 = vpop.f32.mrf.mxu0
  %v1189 = vadd.f32 0.0, %v1188
  %v1190 = vpop.f32.mrf.mxu0
  %v1191 = vadd.f32 0.0, %v1190
  %1192 = vdwg.mxu0
  %v1193 = vpack.c.bf16 %v1147, %v1145
  %v1194 = vpack.c.bf16 %v1176, %v1174
  %v1195 = vpack.c.bf16 %v1152, %v1150
  %v1196 = vpack.c.bf16 %v1181, %v1179
  %v1197 = vpack.c.bf16 %v1157, %v1155
  %v1198 = vpack.c.bf16 %v1186, %v1184
  %v1199 = vpack.c.bf16 %v1162, %v1160
  %v1200 = vpack.c.bf16 %v1191, %v1189
  %v1201 = vld [vmem:[%s5] sm:$0xf]
  %v1202 = vld [vmem:[%s5 + $0x4] sm:$0xf]
  %v1203 = vld [vmem:[%s5 + $0x8] sm:$0xf]
  %v1204 = vld [vmem:[%s5 + $0xc] sm:$0xf]
  %v1205 = vld [vmem:[%s5 + $0x10] sm:$0xf]
  %v1206 = vld [vmem:[%s5 + $0x14] sm:$0xf]
  %v1207 = vld [vmem:[%s5 + $0x18] sm:$0xf]
  %v1208 = vld [vmem:[%s5 + $0x1c] sm:$0xf]
  %v1209 = vld [vmem:[%s5 + $0x20] sm:$0xf]
  %v1210 = vld [vmem:[%s5 + $0x24] sm:$0xf]
  %v1211 = vld [vmem:[%s5 + $0x28] sm:$0xf]
  %v1212 = vld [vmem:[%s5 + $0x2c] sm:$0xf]
  %v1213 = vld [vmem:[%s5 + $0x30] sm:$0xf]
  %v1214 = vld [vmem:[%s5 + $0x34] sm:$0xf]
  %v1215 = vld [vmem:[%s5 + $0x38] sm:$0xf]
  %v1216 = vld [vmem:[%s5 + $0x3c] sm:$0xf]
  %v1217 = vld [vmem:[%s5 + $0x40] sm:$0xf]
  %v1218 = vld [vmem:[%s5 + $0x44] sm:$0xf]
  %v1219 = vld [vmem:[%s5 + $0x48] sm:$0xf]
  %v1220 = vld [vmem:[%s5 + $0x4c] sm:$0xf]
  %v1221 = vld [vmem:[%s5 + $0x50] sm:$0xf]
  %v1222 = vld [vmem:[%s5 + $0x54] sm:$0xf]
  %v1223 = vld [vmem:[%s5 + $0x58] sm:$0xf]
  %v1224 = vld [vmem:[%s5 + $0x5c] sm:$0xf]
  %v1225 = vld [vmem:[%s5 + $0x60] sm:$0xf]
  %v1226 = vld [vmem:[%s5 + $0x64] sm:$0xf]
  %v1227 = vld [vmem:[%s5 + $0x68] sm:$0xf]
  %v1228 = vld [vmem:[%s5 + $0x6c] sm:$0xf]
  %v1229 = vld [vmem:[%s5 + $0x70] sm:$0xf]
  %v1230 = vld [vmem:[%s5 + $0x74] sm:$0xf]
  %v1231 = vld [vmem:[%s5 + $0x78] sm:$0xf]
  %v1232 = vld [vmem:[%s5 + $0x7c] sm:$0xf]
  %v1265 = vunpack.c.l.b16 %v1201
  %v1266 = vunpack.c.l.b16 %v1202
  %v1267 = vunpack.c.l.b16 %v1203
  %v1268 = vunpack.c.l.b16 %v1204
  %v1269 = vunpack.c.l.b16 %v1205
  %v1270 = vunpack.c.l.b16 %v1206
  %v1271 = vunpack.c.l.b16 %v1207
  %v1272 = vunpack.c.l.b16 %v1208
  %v1273 = vunpack.c.l.b16 %v1209
  %v1274 = vunpack.c.l.b16 %v1210
  %v1275 = vunpack.c.l.b16 %v1211
  %v1276 = vunpack.c.l.b16 %v1212
  %v1277 = vunpack.c.l.b16 %v1213
  %v1278 = vunpack.c.l.b16 %v1214
  %v1279 = vunpack.c.l.b16 %v1215
  %v1280 = vunpack.c.l.b16 %v1216
  %v1281 = vunpack.c.l.b16 %v1217
  %v1282 = vunpack.c.l.b16 %v1218
  %v1283 = vunpack.c.l.b16 %v1219
  %v1284 = vunpack.c.l.b16 %v1220
  %v1285 = vunpack.c.l.b16 %v1221
  %v1286 = vunpack.c.l.b16 %v1222
  %v1287 = vunpack.c.l.b16 %v1223
  %v1288 = vunpack.c.l.b16 %v1224
  %v1289 = vunpack.c.l.b16 %v1225
  %v1290 = vunpack.c.l.b16 %v1226
  %v1291 = vunpack.c.l.b16 %v1227
  %v1292 = vunpack.c.l.b16 %v1228
  %v1293 = vunpack.c.l.b16 %v1229
  %v1294 = vunpack.c.l.b16 %v1230
  %v1295 = vunpack.c.l.b16 %v1231
  %v1296 = vunpack.c.l.b16 %v1232
  %v1297 = vpack.c.b16 %v1266, %v1265
  %v1298 = vpack.c.b16 %v1268, %v1267
  %v1299 = vpack.c.b16 %v1270, %v1269
  %v1300 = vpack.c.b16 %v1272, %v1271
  %v1301 = vpack.c.b16 %v1274, %v1273
  %v1302 = vpack.c.b16 %v1276, %v1275
  %v1303 = vpack.c.b16 %v1278, %v1277
  %v1304 = vpack.c.b16 %v1280, %v1279
  %v1305 = vpack.c.b16 %v1282, %v1281
  %v1306 = vpack.c.b16 %v1284, %v1283
  %v1307 = vpack.c.b16 %v1286, %v1285
  %v1308 = vpack.c.b16 %v1288, %v1287
  %v1309 = vpack.c.b16 %v1290, %v1289
  %v1310 = vpack.c.b16 %v1292, %v1291
  %v1311 = vpack.c.b16 %v1294, %v1293
  %v1312 = vpack.c.b16 %v1296, %v1295
  %1329 = vmatpush.bf16.msra.mxu0 %v1304
  %1330 = vmatpush.bf16.msra.mxu0 %v1303
  %1331 = vmatpush.bf16.msra.mxu0 %v1302
  %1332 = vmatpush.bf16.msra.mxu0 %v1301
  %1333 = vmatpush.bf16.msra.mxu0 %v1300
  %1334 = vmatpush.bf16.msra.mxu0 %v1299
  %1335 = vmatpush.bf16.msra.mxu0 %v1298
  %1336 = vmatpush.bf16.msra.mxu0 %v1297
  %1337 = vmatmul.bf16.gmra.mxu0 %v1193
  %v1338 = vpop.f32.mrf.mxu0
  %v1339 = vadd.f32 0.0, %v1338
  %v1340 = vpop.f32.mrf.mxu0
  %v1341 = vadd.f32 0.0, %v1340
  %1342 = vmatmul.bf16.gmra.mxu0 %v1195
  %v1343 = vpop.f32.mrf.mxu0
  %v1344 = vadd.f32 0.0, %v1343
  %v1345 = vpop.f32.mrf.mxu0
  %v1346 = vadd.f32 0.0, %v1345
  %1347 = vmatmul.bf16.gmra.mxu0 %v1197
  %v1348 = vpop.f32.mrf.mxu0
  %v1349 = vadd.f32 0.0, %v1348
  %v1350 = vpop.f32.mrf.mxu0
  %v1351 = vadd.f32 0.0, %v1350
  %1352 = vmatmul.bf16.gmra.mxu0 %v1199
  %v1353 = vpop.f32.mrf.mxu0
  %v1354 = vadd.f32 0.0, %v1353
  %v1355 = vpop.f32.mrf.mxu0
  %v1356 = vadd.f32 0.0, %v1355
  %1357 = vdwg.mxu0
  %1358 = vmatpush.bf16.msra.mxu0 %v1312
  %1359 = vmatpush.bf16.msra.mxu0 %v1311
  %1360 = vmatpush.bf16.msra.mxu0 %v1310
  %1361 = vmatpush.bf16.msra.mxu0 %v1309
  %1362 = vmatpush.bf16.msra.mxu0 %v1308
  %1363 = vmatpush.bf16.msra.mxu0 %v1307
  %1364 = vmatpush.bf16.msra.mxu0 %v1306
  %1365 = vmatpush.bf16.msra.mxu0 %v1305
  %1366 = vmatmul.bf16.gmra.mxu0 %v1194
  %v1367 = vpop.f32.mrf.mxu0
  %v1368 = vadd.f32 %v1339, %v1367
  %v1369 = vpop.f32.mrf.mxu0
  %v1370 = vadd.f32 %v1341, %v1369
  %1371 = vmatmul.bf16.gmra.mxu0 %v1196
  %v1372 = vpop.f32.mrf.mxu0
  %v1373 = vadd.f32 %v1344, %v1372
  %v1374 = vpop.f32.mrf.mxu0
  %v1375 = vadd.f32 %v1346, %v1374
  %1376 = vmatmul.bf16.gmra.mxu0 %v1198
  %v1377 = vpop.f32.mrf.mxu0
  %v1378 = vadd.f32 %v1349, %v1377
  %v1379 = vpop.f32.mrf.mxu0
  %v1380 = vadd.f32 %v1351, %v1379
  %1381 = vmatmul.bf16.gmra.mxu0 %v1200
  %v1382 = vpop.f32.mrf.mxu0
  %v1383 = vadd.f32 %v1354, %v1382
  %v1384 = vpop.f32.mrf.mxu0
  %v1385 = vadd.f32 %v1356, %v1384
  %1386 = vdwg.mxu0
  %v1419 = vunpack.c.l.b16 %v1063
  %v1420 = vunpack.c.l.b16 %v1064
  %v1421 = vunpack.c.l.b16 %v1065
  %v1422 = vunpack.c.l.b16 %v1066
  %v1423 = vunpack.c.l.b16 %v1067
  %v1424 = vunpack.c.l.b16 %v1068
  %v1425 = vunpack.c.l.b16 %v1069
  %v1426 = vunpack.c.l.b16 %v1070
  %v1427 = vunpack.c.l.b16 %v1071
  %v1428 = vunpack.c.l.b16 %v1072
  %v1429 = vunpack.c.l.b16 %v1073
  %v1430 = vunpack.c.l.b16 %v1074
  %v1431 = vunpack.c.l.b16 %v1075
  %v1432 = vunpack.c.l.b16 %v1076
  %v1433 = vunpack.c.l.b16 %v1077
  %v1434 = vunpack.c.l.b16 %v1078
  %v1435 = vunpack.c.l.b16 %v1079
  %v1436 = vunpack.c.l.b16 %v1080
  %v1437 = vunpack.c.l.b16 %v1081
  %v1438 = vunpack.c.l.b16 %v1082
  %v1439 = vunpack.c.l.b16 %v1083
  %v1440 = vunpack.c.l.b16 %v1084
  %v1441 = vunpack.c.l.b16 %v1085
  %v1442 = vunpack.c.l.b16 %v1086
  %v1443 = vunpack.c.l.b16 %v1087
  %v1444 = vunpack.c.l.b16 %v1088
  %v1445 = vunpack.c.l.b16 %v1089
  %v1446 = vunpack.c.l.b16 %v1090
  %v1447 = vunpack.c.l.b16 %v1091
  %v1448 = vunpack.c.l.b16 %v1092
  %v1449 = vunpack.c.l.b16 %v1093
  %v1450 = vunpack.c.l.b16 %v1094
  %v1451 = vpack.c.b16 %v1420, %v1419
  %v1452 = vpack.c.b16 %v1422, %v1421
  %v1453 = vpack.c.b16 %v1424, %v1423
  %v1454 = vpack.c.b16 %v1426, %v1425
  %v1455 = vpack.c.b16 %v1428, %v1427
  %v1456 = vpack.c.b16 %v1430, %v1429
  %v1457 = vpack.c.b16 %v1432, %v1431
  %v1458 = vpack.c.b16 %v1434, %v1433
  %v1459 = vpack.c.b16 %v1436, %v1435
  %v1460 = vpack.c.b16 %v1438, %v1437
  %v1461 = vpack.c.b16 %v1440, %v1439
  %v1462 = vpack.c.b16 %v1442, %v1441
  %v1463 = vpack.c.b16 %v1444, %v1443
  %v1464 = vpack.c.b16 %v1446, %v1445
  %v1465 = vpack.c.b16 %v1448, %v1447
  %v1466 = vpack.c.b16 %v1450, %v1449
  %1483 = vmatpush.bf16.msra.mxu0 %v1458
  %1484 = vmatpush.bf16.msra.mxu0 %v1457
  %1485 = vmatpush.bf16.msra.mxu0 %v1456
  %1486 = vmatpush.bf16.msra.mxu0 %v1455
  %1487 = vmatpush.bf16.msra.mxu0 %v1454
  %1488 = vmatpush.bf16.msra.mxu0 %v1453
  %1489 = vmatpush.bf16.msra.mxu0 %v1452
  %1490 = vmatpush.bf16.msra.mxu0 %v1451
  %1491 = vmatmul.bf16.gmra.mxu0 %v1054
  %v1492 = vpop.f32.mrf.mxu0
  %v1493 = vadd.f32 %v1368, %v1492
  %v1494 = vpop.f32.mrf.mxu0
  %v1495 = vadd.f32 %v1370, %v1494
  %1496 = vmatmul.bf16.gmra.mxu0 %v1056
  %v1497 = vpop.f32.mrf.mxu0
  %v1498 = vadd.f32 %v1373, %v1497
  %v1499 = vpop.f32.mrf.mxu0
  %v1500 = vadd.f32 %v1375, %v1499
  %1501 = vmatmul.bf16.gmra.mxu0 %v1058
  %v1502 = vpop.f32.mrf.mxu0
  %v1503 = vadd.f32 %v1378, %v1502
  %v1504 = vpop.f32.mrf.mxu0
  %v1505 = vadd.f32 %v1380, %v1504
  %1506 = vmatmul.bf16.gmra.mxu0 %v1060
  %v1507 = vpop.f32.mrf.mxu0
  %v1508 = vadd.f32 %v1383, %v1507
  %v1509 = vpop.f32.mrf.mxu0
  %v1510 = vadd.f32 %v1385, %v1509
  %1511 = vdwg.mxu0
  %1512 = vmatpush.bf16.msra.mxu0 %v1466
  %1513 = vmatpush.bf16.msra.mxu0 %v1465
  %1514 = vmatpush.bf16.msra.mxu0 %v1464
  %1515 = vmatpush.bf16.msra.mxu0 %v1463
  %1516 = vmatpush.bf16.msra.mxu0 %v1462
  %1517 = vmatpush.bf16.msra.mxu0 %v1461
  %1518 = vmatpush.bf16.msra.mxu0 %v1460
  %1519 = vmatpush.bf16.msra.mxu0 %v1459
  %1520 = vmatmul.bf16.gmra.mxu0 %v1055
  %v1521 = vpop.f32.mrf.mxu0
  %v1522 = vadd.f32 %v1493, %v1521
  %v1523 = vpop.f32.mrf.mxu0
  %v1524 = vadd.f32 %v1495, %v1523
  %1525 = vmatmul.bf16.gmra.mxu0 %v1057
  %v1526 = vpop.f32.mrf.mxu0
  %v1527 = vadd.f32 %v1498, %v1526
  %v1528 = vpop.f32.mrf.mxu0
  %v1529 = vadd.f32 %v1500, %v1528
  %1530 = vmatmul.bf16.gmra.mxu0 %v1059
  %v1531 = vpop.f32.mrf.mxu0
  %v1532 = vadd.f32 %v1503, %v1531
  %v1533 = vpop.f32.mrf.mxu0
  %v1534 = vadd.f32 %v1505, %v1533
  %1535 = vmatmul.bf16.gmra.mxu0 %v1061
  %v1536 = vpop.f32.mrf.mxu0
  %v1537 = vadd.f32 %v1508, %v1536
  %v1538 = vpop.f32.mrf.mxu0
  %v1539 = vadd.f32 %v1510, %v1538
  %1540 = vdwg.mxu0
  %s1541 = scalar_lea.vmem %s4, 32
  %v1542 = vld [vmem:[%s1541] sm:$0xf]
  %v1543 = vld [vmem:[%s1541 + $0x4] sm:$0xf]
  %v1544 = vld [vmem:[%s1541 + $0x8] sm:$0xf]
  %v1545 = vld [vmem:[%s1541 + $0xc] sm:$0xf]
  %v1546 = vld [vmem:[%s1541 + $0x10] sm:$0xf]
  %v1547 = vld [vmem:[%s1541 + $0x14] sm:$0xf]
  %v1548 = vld [vmem:[%s1541 + $0x18] sm:$0xf]
  %v1549 = vld [vmem:[%s1541 + $0x1c] sm:$0xf]
  %v1558 = vunpack.c.l.b16 %v1542
  %v1559 = vunpack.c.l.b16 %v1543
  %v1560 = vunpack.c.l.b16 %v1544
  %v1561 = vunpack.c.l.b16 %v1545
  %v1562 = vunpack.c.l.b16 %v1546
  %v1563 = vunpack.c.l.b16 %v1547
  %v1564 = vunpack.c.l.b16 %v1548
  %v1565 = vunpack.c.l.b16 %v1549
  %v1566 = vpack.c.b16 %v1559, %v1558
  %v1567 = vpack.c.b16 %v1561, %v1560
  %v1568 = vpack.c.b16 %v1563, %v1562
  %v1569 = vpack.c.b16 %v1565, %v1564
  %v1571 = vsel %vm337, %v1566, 0
  %v1574 = vsel %vm337, %v1567, 0
  %v1577 = vsel %vm337, %v1568, 0
  %v1580 = vsel %vm337, %v1569, 0
  %1582 = vmatpush.bf16.msra.mxu0 0
  %1583 = vmatpush.bf16.msra.mxu0 0
  %1584 = vmatpush.bf16.msra.mxu0 0
  %1585 = vmatpush.bf16.msra.mxu0 0
  %1586 = vmatpush.bf16.msra.mxu0 %v1060
  %1587 = vmatpush.bf16.msra.mxu0 %v1058
  %1588 = vmatpush.bf16.msra.mxu0 %v1056
  %1589 = vmatpush.bf16.msra.mxu0 %v1054
  %1590 = vmatmul.bf16.gmra.mxu0 %v1571
  %v1591 = vpop.f32.mrf.mxu0
  %v1592 = vadd.f32 0.0, %v1591
  %v1593 = vpop.f32.mrf.mxu0
  %v1594 = vadd.f32 0.0, %v1593
  %1595 = vmatmul.bf16.gmra.mxu0 %v1574
  %v1596 = vpop.f32.mrf.mxu0
  %v1597 = vadd.f32 0.0, %v1596
  %v1598 = vpop.f32.mrf.mxu0
  %v1599 = vadd.f32 0.0, %v1598
  %1600 = vmatmul.bf16.gmra.mxu0 %v1577
  %v1601 = vpop.f32.mrf.mxu0
  %v1602 = vadd.f32 0.0, %v1601
  %v1603 = vpop.f32.mrf.mxu0
  %v1604 = vadd.f32 0.0, %v1603
  %1605 = vmatmul.bf16.gmra.mxu0 %v1580
  %v1606 = vpop.f32.mrf.mxu0
  %v1607 = vadd.f32 0.0, %v1606
  %v1608 = vpop.f32.mrf.mxu0
  %v1609 = vadd.f32 0.0, %v1608
  %1610 = vdwg.mxu0
  %1611 = vmatpush.bf16.msra.mxu0 0
  %1612 = vmatpush.bf16.msra.mxu0 0
  %1613 = vmatpush.bf16.msra.mxu0 0
  %1614 = vmatpush.bf16.msra.mxu0 0
  %1615 = vmatpush.bf16.msra.mxu0 %v1061
  %1616 = vmatpush.bf16.msra.mxu0 %v1059
  %1617 = vmatpush.bf16.msra.mxu0 %v1057
  %1618 = vmatpush.bf16.msra.mxu0 %v1055
  %1619 = vmatmul.bf16.gmra.mxu0 %v1571
  %v1620 = vpop.f32.mrf.mxu0
  %v1621 = vadd.f32 0.0, %v1620
  %v1622 = vpop.f32.mrf.mxu0
  %v1623 = vadd.f32 0.0, %v1622
  %1624 = vmatmul.bf16.gmra.mxu0 %v1574
  %v1625 = vpop.f32.mrf.mxu0
  %v1626 = vadd.f32 0.0, %v1625
  %v1627 = vpop.f32.mrf.mxu0
  %v1628 = vadd.f32 0.0, %v1627
  %1629 = vmatmul.bf16.gmra.mxu0 %v1577
  %v1630 = vpop.f32.mrf.mxu0
  %v1631 = vadd.f32 0.0, %v1630
  %v1632 = vpop.f32.mrf.mxu0
  %v1633 = vadd.f32 0.0, %v1632
  %1634 = vmatmul.bf16.gmra.mxu0 %v1580
  %v1635 = vpop.f32.mrf.mxu0
  %v1636 = vadd.f32 0.0, %v1635
  %v1637 = vpop.f32.mrf.mxu0
  %v1638 = vadd.f32 0.0, %v1637
  %1639 = vdwg.mxu0
  %v1640 = vpack.c.bf16 %v1594, %v1592
  %v1641 = vpack.c.bf16 %v1623, %v1621
  %v1642 = vpack.c.bf16 %v1599, %v1597
  %v1643 = vpack.c.bf16 %v1628, %v1626
  %v1644 = vpack.c.bf16 %v1604, %v1602
  %v1645 = vpack.c.bf16 %v1633, %v1631
  %v1646 = vpack.c.bf16 %v1609, %v1607
  %v1647 = vpack.c.bf16 %v1638, %v1636
  %s1648 = scalar_lea.vmem %s5, 256
  %v1649 = vld [vmem:[%s1648] sm:$0xf]
  %v1650 = vld [vmem:[%s1648 + $0x4] sm:$0xf]
  %v1651 = vld [vmem:[%s1648 + $0x8] sm:$0xf]
  %v1652 = vld [vmem:[%s1648 + $0xc] sm:$0xf]
  %v1653 = vld [vmem:[%s1648 + $0x10] sm:$0xf]
  %v1654 = vld [vmem:[%s1648 + $0x14] sm:$0xf]
  %v1655 = vld [vmem:[%s1648 + $0x18] sm:$0xf]
  %v1656 = vld [vmem:[%s1648 + $0x1c] sm:$0xf]
  %v1657 = vld [vmem:[%s1648 + $0x20] sm:$0xf]
  %v1658 = vld [vmem:[%s1648 + $0x24] sm:$0xf]
  %v1659 = vld [vmem:[%s1648 + $0x28] sm:$0xf]
  %v1660 = vld [vmem:[%s1648 + $0x2c] sm:$0xf]
  %v1661 = vld [vmem:[%s1648 + $0x30] sm:$0xf]
  %v1662 = vld [vmem:[%s1648 + $0x34] sm:$0xf]
  %v1663 = vld [vmem:[%s1648 + $0x38] sm:$0xf]
  %v1664 = vld [vmem:[%s1648 + $0x3c] sm:$0xf]
  %v1665 = vld [vmem:[%s1648 + $0x40] sm:$0xf]
  %v1666 = vld [vmem:[%s1648 + $0x44] sm:$0xf]
  %v1667 = vld [vmem:[%s1648 + $0x48] sm:$0xf]
  %v1668 = vld [vmem:[%s1648 + $0x4c] sm:$0xf]
  %v1669 = vld [vmem:[%s1648 + $0x50] sm:$0xf]
  %v1670 = vld [vmem:[%s1648 + $0x54] sm:$0xf]
  %v1671 = vld [vmem:[%s1648 + $0x58] sm:$0xf]
  %v1672 = vld [vmem:[%s1648 + $0x5c] sm:$0xf]
  %v1673 = vld [vmem:[%s1648 + $0x60] sm:$0xf]
  %v1674 = vld [vmem:[%s1648 + $0x64] sm:$0xf]
  %v1675 = vld [vmem:[%s1648 + $0x68] sm:$0xf]
  %v1676 = vld [vmem:[%s1648 + $0x6c] sm:$0xf]
  %v1677 = vld [vmem:[%s1648 + $0x70] sm:$0xf]
  %v1678 = vld [vmem:[%s1648 + $0x74] sm:$0xf]
  %v1679 = vld [vmem:[%s1648 + $0x78] sm:$0xf]
  %v1680 = vld [vmem:[%s1648 + $0x7c] sm:$0xf]
  %v1713 = vunpack.c.l.b16 %v1649
  %v1714 = vunpack.c.l.b16 %v1650
  %v1715 = vunpack.c.l.b16 %v1651
  %v1716 = vunpack.c.l.b16 %v1652
  %v1717 = vunpack.c.l.b16 %v1653
  %v1718 = vunpack.c.l.b16 %v1654
  %v1719 = vunpack.c.l.b16 %v1655
  %v1720 = vunpack.c.l.b16 %v1656
  %v1721 = vunpack.c.l.b16 %v1657
  %v1722 = vunpack.c.l.b16 %v1658
  %v1723 = vunpack.c.l.b16 %v1659
  %v1724 = vunpack.c.l.b16 %v1660
  %v1725 = vunpack.c.l.b16 %v1661
  %v1726 = vunpack.c.l.b16 %v1662
  %v1727 = vunpack.c.l.b16 %v1663
  %v1728 = vunpack.c.l.b16 %v1664
  %v1729 = vunpack.c.l.b16 %v1665
  %v1730 = vunpack.c.l.b16 %v1666
  %v1731 = vunpack.c.l.b16 %v1667
  %v1732 = vunpack.c.l.b16 %v1668
  %v1733 = vunpack.c.l.b16 %v1669
  %v1734 = vunpack.c.l.b16 %v1670
  %v1735 = vunpack.c.l.b16 %v1671
  %v1736 = vunpack.c.l.b16 %v1672
  %v1737 = vunpack.c.l.b16 %v1673
  %v1738 = vunpack.c.l.b16 %v1674
  %v1739 = vunpack.c.l.b16 %v1675
  %v1740 = vunpack.c.l.b16 %v1676
  %v1741 = vunpack.c.l.b16 %v1677
  %v1742 = vunpack.c.l.b16 %v1678
  %v1743 = vunpack.c.l.b16 %v1679
  %v1744 = vunpack.c.l.b16 %v1680
  %v1745 = vpack.c.b16 %v1714, %v1713
  %v1746 = vpack.c.b16 %v1716, %v1715
  %v1747 = vpack.c.b16 %v1718, %v1717
  %v1748 = vpack.c.b16 %v1720, %v1719
  %v1749 = vpack.c.b16 %v1722, %v1721
  %v1750 = vpack.c.b16 %v1724, %v1723
  %v1751 = vpack.c.b16 %v1726, %v1725
  %v1752 = vpack.c.b16 %v1728, %v1727
  %v1753 = vpack.c.b16 %v1730, %v1729
  %v1754 = vpack.c.b16 %v1732, %v1731
  %v1755 = vpack.c.b16 %v1734, %v1733
  %v1756 = vpack.c.b16 %v1736, %v1735
  %v1757 = vpack.c.b16 %v1738, %v1737
  %v1758 = vpack.c.b16 %v1740, %v1739
  %v1759 = vpack.c.b16 %v1742, %v1741
  %v1760 = vpack.c.b16 %v1744, %v1743
  %1777 = vmatpush.bf16.msra.mxu0 %v1752
  %1778 = vmatpush.bf16.msra.mxu0 %v1751
  %1779 = vmatpush.bf16.msra.mxu0 %v1750
  %1780 = vmatpush.bf16.msra.mxu0 %v1749
  %1781 = vmatpush.bf16.msra.mxu0 %v1748
  %1782 = vmatpush.bf16.msra.mxu0 %v1747
  %1783 = vmatpush.bf16.msra.mxu0 %v1746
  %1784 = vmatpush.bf16.msra.mxu0 %v1745
  %1785 = vmatmul.bf16.gmra.mxu0 %v1640
  %v1786 = vpop.f32.mrf.mxu0
  %v1787 = vadd.f32 0.0, %v1786
  %v1788 = vpop.f32.mrf.mxu0
  %v1789 = vadd.f32 0.0, %v1788
  %1790 = vmatmul.bf16.gmra.mxu0 %v1642
  %v1791 = vpop.f32.mrf.mxu0
  %v1792 = vadd.f32 0.0, %v1791
  %v1793 = vpop.f32.mrf.mxu0
  %v1794 = vadd.f32 0.0, %v1793
  %1795 = vmatmul.bf16.gmra.mxu0 %v1644
  %v1796 = vpop.f32.mrf.mxu0
  %v1797 = vadd.f32 0.0, %v1796
  %v1798 = vpop.f32.mrf.mxu0
  %v1799 = vadd.f32 0.0, %v1798
  %1800 = vmatmul.bf16.gmra.mxu0 %v1646
  %v1801 = vpop.f32.mrf.mxu0
  %v1802 = vadd.f32 0.0, %v1801
  %v1803 = vpop.f32.mrf.mxu0
  %v1804 = vadd.f32 0.0, %v1803
  %1805 = vdwg.mxu0
  %1806 = vmatpush.bf16.msra.mxu0 %v1760
  %1807 = vmatpush.bf16.msra.mxu0 %v1759
  %1808 = vmatpush.bf16.msra.mxu0 %v1758
  %1809 = vmatpush.bf16.msra.mxu0 %v1757
  %1810 = vmatpush.bf16.msra.mxu0 %v1756
  %1811 = vmatpush.bf16.msra.mxu0 %v1755
  %1812 = vmatpush.bf16.msra.mxu0 %v1754
  %1813 = vmatpush.bf16.msra.mxu0 %v1753
  %1814 = vmatmul.bf16.gmra.mxu0 %v1641
  %v1815 = vpop.f32.mrf.mxu0
  %v1816 = vadd.f32 %v1787, %v1815
  %v1817 = vpop.f32.mrf.mxu0
  %v1818 = vadd.f32 %v1789, %v1817
  %1819 = vmatmul.bf16.gmra.mxu0 %v1643
  %v1820 = vpop.f32.mrf.mxu0
  %v1821 = vadd.f32 %v1792, %v1820
  %v1822 = vpop.f32.mrf.mxu0
  %v1823 = vadd.f32 %v1794, %v1822
  %1824 = vmatmul.bf16.gmra.mxu0 %v1645
  %v1825 = vpop.f32.mrf.mxu0
  %v1826 = vadd.f32 %v1797, %v1825
  %v1827 = vpop.f32.mrf.mxu0
  %v1828 = vadd.f32 %v1799, %v1827
  %1829 = vmatmul.bf16.gmra.mxu0 %v1647
  %v1830 = vpop.f32.mrf.mxu0
  %v1831 = vadd.f32 %v1802, %v1830
  %v1832 = vpop.f32.mrf.mxu0
  %v1833 = vadd.f32 %v1804, %v1832
  %1834 = vdwg.mxu0
  %v1835 = vadd.f32 %v1522, %v1816
  %v1836 = vadd.f32 %v1524, %v1818
  %v1837 = vadd.f32 %v1527, %v1821
  %v1838 = vadd.f32 %v1529, %v1823
  %v1839 = vadd.f32 %v1532, %v1826
  %v1840 = vadd.f32 %v1534, %v1828
  %v1841 = vadd.f32 %v1537, %v1831
  %v1842 = vadd.f32 %v1539, %v1833
  %v1843 = vadd.f32 %v1835, %v1836
  %v1844 = vadd.f32 %v1843, %v1837
  %v1845 = vadd.f32 %v1844, %v1838
  %v1846 = vadd.f32 %v1845, %v1839
  %v1847 = vadd.f32 %v1846, %v1840
  %v1848 = vadd.f32 %v1847, %v1841
  %v1849 = vadd.f32 %v1848, %v1842
  %v1850 = vld [vmem:[%s7] sm:$0xff]
  %v1851 = vld [vmem:[%s7 + $0x8] sm:$0xff]
  %v1852 = vld [vmem:[%s7 + $0x10] sm:$0xff]
  %v1853 = vld [vmem:[%s7 + $0x18] sm:$0xff]
  %v1854 = vld [vmem:[%s7 + $0x20] sm:$0xff]
  %v1855 = vld [vmem:[%s7 + $0x28] sm:$0xff]
  %v1856 = vld [vmem:[%s7 + $0x30] sm:$0xff]
  %v1857 = vld [vmem:[%s7 + $0x38] sm:$0xff]
  %v1858 = vld [vmem:[%s7 + $0x40] sm:$0xff]
  %v1859 = vld [vmem:[%s7 + $0x48] sm:$0xff]
  %v1860 = vld [vmem:[%s7 + $0x50] sm:$0xff]
  %v1861 = vld [vmem:[%s7 + $0x58] sm:$0xff]
  %v1862 = vld [vmem:[%s7 + $0x60] sm:$0xff]
  %v1863 = vld [vmem:[%s7 + $0x68] sm:$0xff]
  %v1864 = vld [vmem:[%s7 + $0x70] sm:$0xff]
  %v1865 = vld [vmem:[%s7 + $0x78] sm:$0xff]
  %1866 = vmatpush.msra.mxu0 %v1865
  %1867 = vmatpush.msra.mxu0 %v1864
  %1868 = vmatpush.msra.mxu0 %v1863
  %1869 = vmatpush.msra.mxu0 %v1862
  %1870 = vmatpush.msra.mxu0 %v1861
  %1871 = vmatpush.msra.mxu0 %v1860
  %1872 = vmatpush.msra.mxu0 %v1859
  %1873 = vmatpush.msra.mxu0 %v1858
  %1874 = vmatpush.msra.mxu0 %v1857
  %1875 = vmatpush.msra.mxu0 %v1856
  %1876 = vmatpush.msra.mxu0 %v1855
  %1877 = vmatpush.msra.mxu0 %v1854
  %1878 = vmatpush.msra.mxu0 %v1853
  %1879 = vmatpush.msra.mxu0 %v1852
  %1880 = vmatpush.msra.mxu0 %v1851
  %1881 = vmatpush.msra.mxu0 %v1850
  %1882 = vmatmul.f32.gmra.mxu0 %v1849
  %v1883 = vpop.f32.mrf.mxu0
  %v1884 = vadd.f32 0.0, %v1883
  %1885 = vdwg.mxu0
  %v1886 = vrot.slane %v1884, 4
  %v1887 = vadd.f32 %v1884, %v1886
  %v1888 = vrot.slane %v1887, 2
  %v1889 = vadd.f32 %v1887, %v1888
  %v1890 = vrot.slane %v1889, 1
  %v1891 = vadd.f32 %v1889, %v1890
  %v1892 = vmul.f32 %v1891, 0.00048828125
  %v1893 = vsub.f32 %v1835, %v1892
  %v1894 = vsub.f32 %v1836, %v1892
  %v1895 = vsub.f32 %v1837, %v1892
  %v1896 = vsub.f32 %v1838, %v1892
  %v1897 = vsub.f32 %v1839, %v1892
  %v1898 = vsub.f32 %v1840, %v1892
  %v1899 = vsub.f32 %v1841, %v1892
  %v1900 = vsub.f32 %v1842, %v1892
  %v1901 = vmul.f32 %v1893, %v1893
  %v1902 = vmul.f32 %v1894, %v1894
  %v1903 = vmul.f32 %v1895, %v1895
  %v1904 = vmul.f32 %v1896, %v1896
  %v1905 = vmul.f32 %v1897, %v1897
  %v1906 = vmul.f32 %v1898, %v1898
  %v1907 = vmul.f32 %v1899, %v1899
  %v1908 = vmul.f32 %v1900, %v1900
  %v1909 = vadd.f32 %v1901, %v1902
  %v1910 = vadd.f32 %v1909, %v1903
  %v1911 = vadd.f32 %v1910, %v1904
  %v1912 = vadd.f32 %v1911, %v1905
  %v1913 = vadd.f32 %v1912, %v1906
  %v1914 = vadd.f32 %v1913, %v1907
  %v1915 = vadd.f32 %v1914, %v1908
  %1916 = vmatpush.msra.mxu0 %v1865
  %1917 = vmatpush.msra.mxu0 %v1864
  %1918 = vmatpush.msra.mxu0 %v1863
  %1919 = vmatpush.msra.mxu0 %v1862
  %1920 = vmatpush.msra.mxu0 %v1861
  %1921 = vmatpush.msra.mxu0 %v1860
  %1922 = vmatpush.msra.mxu0 %v1859
  %1923 = vmatpush.msra.mxu0 %v1858
  %1924 = vmatpush.msra.mxu0 %v1857
  %1925 = vmatpush.msra.mxu0 %v1856
  %1926 = vmatpush.msra.mxu0 %v1855
  %1927 = vmatpush.msra.mxu0 %v1854
  %1928 = vmatpush.msra.mxu0 %v1853
  %1929 = vmatpush.msra.mxu0 %v1852
  %1930 = vmatpush.msra.mxu0 %v1851
  %1931 = vmatpush.msra.mxu0 %v1850
  %1932 = vmatmul.f32.gmra.mxu0 %v1915
  %v1933 = vpop.f32.mrf.mxu0
  %v1934 = vadd.f32 0.0, %v1933
  %1935 = vdwg.mxu0
  %v1936 = vrot.slane %v1934, 4
  %v1937 = vadd.f32 %v1934, %v1936
  %v1938 = vrot.slane %v1937, 2
  %v1939 = vadd.f32 %v1937, %v1938
  %v1940 = vrot.slane %v1939, 1
  %v1941 = vadd.f32 %v1939, %v1940
  %v1942 = vmul.f32 %v1941, 0.00048828125
  %v1943 = vld [vmem:[%s10] sm:$0x1]
  %v1944 = vadd.f32 %v1942, 1e-05
  %v1945 = vrsqrt.pop %v1944
  %v1946 = vmul.f32 %v1945, %v1944
  %v1947 = vmul.f32 %v1946, %v1945
  %v1948 = vmul.f32 0.5, %v1947
  %v1949 = vsub.f32 1.5, %v1948
  %v1950 = vmul.f32 %v1945, %v1949
  %vm1951 = vweird.f32 %v1944
  %vm1952 = vweird.f32 %v1945
  %vm1953 = vmor %vm1951, %vm1952
  %v1954 = vsel %vm1953, %v1945, %v1950
  %v1955 = vmul.f32 %v1943, %v1954
  %v1956 = vld [vmem:[%s3] sm:$0xf]
  %v1957 = vld [vmem:[%s3 + $0x4] sm:$0xf]
  %v1958 = vld [vmem:[%s3 + $0x8] sm:$0xf]
  %v1959 = vld [vmem:[%s3 + $0xc] sm:$0xf]
  %v1960 = vld [vmem:[%s3 + $0x10] sm:$0xf]
  %v1961 = vld [vmem:[%s3 + $0x14] sm:$0xf]
  %v1962 = vld [vmem:[%s3 + $0x18] sm:$0xf]
  %v1963 = vld [vmem:[%s3 + $0x1c] sm:$0xf]
  %v1972 = vunpack.c.l.b16 %v1956
  %v1973 = vunpack.c.l.b16 %v1957
  %v1974 = vunpack.c.l.b16 %v1958
  %v1975 = vunpack.c.l.b16 %v1959
  %v1976 = vunpack.c.l.b16 %v1960
  %v1977 = vunpack.c.l.b16 %v1961
  %v1978 = vunpack.c.l.b16 %v1962
  %v1979 = vunpack.c.l.b16 %v1963
  %v1980 = vpack.c.b16 %v1973, %v1972
  %v1981 = vpack.c.b16 %v1975, %v1974
  %v1982 = vpack.c.b16 %v1977, %v1976
  %v1983 = vpack.c.b16 %v1979, %v1978
  %1988 = vmatpush.bf16.msra.mxu0 0
  %1989 = vmatpush.bf16.msra.mxu0 0
  %1990 = vmatpush.bf16.msra.mxu0 0
  %1991 = vmatpush.bf16.msra.mxu0 0
  %1992 = vmatpush.bf16.msra.mxu0 %v1983
  %1993 = vmatpush.bf16.msra.mxu0 %v1982
  %1994 = vmatpush.bf16.msra.mxu0 %v1981
  %1995 = vmatpush.bf16.msra.mxu0 %v1980
  %1996 = vmatmul.bf16.gmra.mxu0 %v339
  %v1997 = vpop.f32.mrf.mxu0
  %v1998 = vadd.f32 0.0, %v1997
  %v1999 = vpop.f32.mrf.mxu0
  %v2000 = vadd.f32 0.0, %v1999
  %2001 = vmatmul.bf16.gmra.mxu0 %v342
  %v2002 = vpop.f32.mrf.mxu0
  %v2003 = vadd.f32 0.0, %v2002
  %v2004 = vpop.f32.mrf.mxu0
  %v2005 = vadd.f32 0.0, %v2004
  %2006 = vmatmul.bf16.gmra.mxu0 %v345
  %v2007 = vpop.f32.mrf.mxu0
  %v2008 = vadd.f32 0.0, %v2007
  %v2009 = vpop.f32.mrf.mxu0
  %v2010 = vadd.f32 0.0, %v2009
  %2011 = vmatmul.bf16.gmra.mxu0 %v348
  %v2012 = vpop.f32.mrf.mxu0
  %v2013 = vadd.f32 0.0, %v2012
  %v2014 = vpop.f32.mrf.mxu0
  %v2015 = vadd.f32 0.0, %v2014
  %2016 = vdwg.mxu0
  %v2018 = vperm.slane %v1955, 0
  %v2020 = vmul.f32 %v1893, %v2018
  %v2021 = vmul.f32 %v1894, %v2018
  %v2022 = vmul.f32 %v1895, %v2018
  %v2023 = vmul.f32 %v1896, %v2018
  %v2024 = vmul.f32 %v1897, %v2018
  %v2025 = vmul.f32 %v1898, %v2018
  %v2026 = vmul.f32 %v1899, %v2018
  %v2027 = vmul.f32 %v1900, %v2018
  %v2028 = vld [vmem:[%s11] sm:$0x1]
  %v2030 = vperm.slane %v2028, 0
  %v2032 = vadd.f32 %v2020, %v2030
  %v2033 = vadd.f32 %v2021, %v2030
  %v2034 = vadd.f32 %v2022, %v2030
  %v2035 = vadd.f32 %v2023, %v2030
  %v2036 = vadd.f32 %v2024, %v2030
  %v2037 = vadd.f32 %v2025, %v2030
  %v2038 = vadd.f32 %v2026, %v2030
  %v2039 = vadd.f32 %v2027, %v2030
  %v2040 = vadd.f32 %v2032, %v1998
  %v2041 = vadd.f32 %v2033, %v2000
  %v2042 = vadd.f32 %v2034, %v2003
  %v2043 = vadd.f32 %v2035, %v2005
  %v2044 = vadd.f32 %v2036, %v2008
  %v2045 = vadd.f32 %v2037, %v2010
  %v2046 = vadd.f32 %v2038, %v2013
  %v2047 = vadd.f32 %v2039, %v2015
  %v2048 = vmax.f32 %v2040, 0.0
  %v2049 = vmax.f32 %v2041, 0.0
  %v2050 = vmax.f32 %v2042, 0.0
  %v2051 = vmax.f32 %v2043, 0.0
  %v2052 = vmax.f32 %v2044, 0.0
  %v2053 = vmax.f32 %v2045, 0.0
  %v2054 = vmax.f32 %v2046, 0.0
  %v2055 = vmax.f32 %v2047, 0.0
  %2056 = vst [vmem:[%s12] sm:$0xff] %v2048
  %2057 = vst [vmem:[%s12 + $0x8] sm:$0xff] %v2049
  %2058 = vst [vmem:[%s12 + $0x10] sm:$0xff] %v2050
  %2059 = vst [vmem:[%s12 + $0x18] sm:$0xff] %v2051
  %2060 = vst [vmem:[%s12 + $0x20] sm:$0xff] %v2052
  %2061 = vst [vmem:[%s12 + $0x28] sm:$0xff] %v2053
  %2062 = vst [vmem:[%s12 + $0x30] sm:$0xff] %v2054
  %2063 = vst [vmem:[%s12 + $0x38] sm:$0xff] %v2055
  // Predicated region
  $region50: #{decoder_block_forward.1} parent=0 // pred_check
    _
  $region51: #{decoder_block_forward.1} parent=0 // pred_check_branch
    %2065 = sbr.rel (0) target = $region53
  $region52: #{decoder_block_forward.1} parent=0 // pred_region
    _
  $region53: #{decoder_block_forward.1} parent=0 // pred_fallthru
    _
  // Predicated region
  $region54: #{decoder_block_forward.1} parent=0 // pred_check
    _
  $region55: #{decoder_block_forward.1} parent=0 // pred_check_branch
    %2067 = sbr.rel (0) target = $region57
  $region56: #{decoder_block_forward.1} parent=0 // pred_region
    _
  $region57: #{decoder_block_forward.1} parent=0 // pred_fallthru
    _

</llo_original>
